<compile_context>
chip_gen: v6e
topology: v6e:2x2x1
jax: 0.10.0
libtpu: 0.0.40
codegen_flags: <defaults>
</compile_context>

<pallas_src>
import functools

import jax
import jax.numpy as jnp
from jax.experimental import pallas as pl
from jax.experimental.pallas import tpu as pltpu


def hetero_gcn_kernel(src_ref, dst_ref, x_ref, wl_ref, bl_ref, wr_ref,
                      wlin_ref, blin_ref, out_ref, acc_ref, *,
                      n_valid, n_tile):
    i = pl.program_id(0)                      # node-row tile   ("parallel")
    k = pl.program_id(1)                      # edge tile       ("arbitrary")
    n_pad, f_pad = x_ref.shape
    e_tile = dst_ref.shape[1]

    @pl.when(k == 0)
    def _init():
        acc_ref[...] = jnp.zeros_like(acc_ref)

    # PyTorch: edge_index[edge_index > N-1] = 0   (applied to both rows).
    # Padding entries are -1: they never match any node index -> contribute 0.
    src = jnp.where(src_ref[...] > n_valid - 1, 0, src_ref[...])   # (E_T, 1)
    dst = jnp.where(dst_ref[...] > n_valid - 1, 0, dst_ref[...])   # (1, E_T)

    # ---- gather x[src] for this edge tile: (E_T, F_pad) = S^T @ x ---------
    # x carries a baked-in ones column in its last (padded) lane, so the last
    # column of `gathered` is 1 per real edge -> degree falls out of the
    # scatter matmul for free.
    src_iota = jax.lax.broadcasted_iota(jnp.int32, (e_tile, n_pad), 1)
    s_onehot = (src_iota == src).astype(jnp.float32).astype(jnp.bfloat16)
    x_b = x_ref[...].astype(jnp.bfloat16)
    gathered = jnp.dot(s_onehot, x_b,
                       preferred_element_type=jnp.float32)          # (E_T, F_pad)

    # ---- scatter-add into this node-row tile: acc += D @ gathered ---------
    row0 = pl.multiple_of(i * n_tile, n_tile)
    dst_iota = row0 + jax.lax.broadcasted_iota(jnp.int32, (n_tile, e_tile), 0)
    d_onehot = (dst_iota == dst).astype(jnp.float32).astype(jnp.bfloat16)
    acc_ref[...] += jnp.dot(d_onehot, gathered.astype(jnp.bfloat16),
                            preferred_element_type=jnp.float32)      # (N_T, F_pad)

    # ---- finalize: mean, SAGE linear maps, ReLU, output Linear ------------
    @pl.when(k == pl.num_programs(1) - 1)
    def _finalize():
        acc = acc_ref[...]                               # (N_T, F_pad) f32
        deg = acc[:, f_pad - 1:]                         # folded degree column
        inv = pl.reciprocal(jnp.maximum(deg, 1.0), approx=False)
        neigh_mean = acc * inv                           # zero-degree rows stay 0
        # (padded lanes of w_l/w_r are zero, so the degree column / ones column
        #  in neigh_mean / x_dst never leak into the result)

        x_dst = x_ref[pl.ds(row0, n_tile), :]            # (N_T, F_pad) f32
        h = (jnp.dot(neigh_mean, wl_ref[...], preferred_element_type=jnp.float32)
             + bl_ref[...]
             + jnp.dot(x_dst, wr_ref[...], preferred_element_type=jnp.float32))
        h = jnp.maximum(h, 0.0)                          # ReLU
        out_ref[...] = (jnp.dot(h, wlin_ref[...],
                                preferred_element_type=jnp.float32)
                        + blin_ref[...])


def _pad2(a, rows, cols):
    a = jnp.asarray(a, jnp.float32)
    return jnp.pad(a, ((0, rows - a.shape[0]), (0, cols - a.shape[1])))


@functools.partial(jax.jit, static_argnames=("n_tile", "e_tile"))
def hetero_gcn_forward(edge_index, x_comment, w_l, b_l, w_r, w_lin, b_lin,
                       *, n_tile=128, e_tile=256):
    n, f_in = x_comment.shape
    hidden = w_l.shape[1]
    out_ch = w_lin.shape[1]
    e = edge_index.shape[1]

    # Lane-dense padding (all last dims multiples of 128; +1 lane reserved for
    # the ones column that yields the degree via the MXU).
    f_pad = pl.cdiv(f_in + 1, 128) * 128
    h_pad = pl.cdiv(hidden, 128) * 128
    o_pad = pl.cdiv(out_ch, 128) * 128
    n_pad = pl.cdiv(n, n_tile) * n_tile
    e_pad = pl.cdiv(e, e_tile) * e_tile

    # Node features: zero-padded, ones column in the last lane (degree trick).
    x_pad = jnp.zeros((n_pad, f_pad), jnp.float32)
    x_pad = x_pad.at[:n, :f_in].set(x_comment.astype(jnp.float32))
    x_pad = x_pad.at[:n, f_pad - 1].set(1.0)

    # Edges split into a lane-oriented dst row and a sublane-oriented src col
    # so both one-hot masks broadcast without any in-kernel transpose.
    # Padding edges use -1 (never matches any node after the clamp).
    src_pad = jnp.full((e_pad, 1), -1, jnp.int32).at[:e, 0].set(
        edge_index[0].astype(jnp.int32))
    dst_pad = jnp.full((1, e_pad), -1, jnp.int32).at[0, :e].set(
        edge_index[1].astype(jnp.int32))

    # Weights / biases, zero-padded to lane-dense slabs.
    wl_pad = _pad2(w_l, f_pad, h_pad)
    wr_pad = _pad2(w_r, f_pad, h_pad)
    bl_pad = _pad2(jnp.asarray(b_l).reshape(1, -1), 1, h_pad)
    wlin_pad = _pad2(w_lin, h_pad, o_pad)
    blin_pad = _pad2(jnp.asarray(b_lin).reshape(1, -1), 1, o_pad)

    num_i = n_pad // n_tile
    num_k = e_pad // e_tile

    flops = (num_i * num_k * 2 * e_tile * f_pad * (n_pad + n_tile)
             + num_i * n_tile * (4 * f_pad * h_pad + 2 * h_pad * o_pad))
    bytes_accessed = 4 * (src_pad.size + dst_pad.size + x_pad.size
                          + wl_pad.size + wr_pad.size + wlin_pad.size
                          + bl_pad.size + blin_pad.size + n_pad * o_pad)

    kernel = functools.partial(hetero_gcn_kernel, n_valid=n, n_tile=n_tile)

    out_full = pl.pallas_call(
        kernel,
        out_shape=jax.ShapeDtypeStruct((n_pad, o_pad), jnp.float32),
        grid_spec=pltpu.PrefetchScalarGridSpec(
            num_scalar_prefetch=0,
            grid=(num_i, num_k),
            in_specs=[
                pl.BlockSpec((e_tile, 1), lambda i, k: (k, 0)),     # src column
                pl.BlockSpec((1, e_tile), lambda i, k: (0, k)),     # dst row
                pl.BlockSpec((n_pad, f_pad), lambda i, k: (0, 0)),  # x (resident)
                pl.BlockSpec((f_pad, h_pad), lambda i, k: (0, 0)),  # w_l
                pl.BlockSpec((1, h_pad), lambda i, k: (0, 0)),      # b_l
                pl.BlockSpec((f_pad, h_pad), lambda i, k: (0, 0)),  # w_r
                pl.BlockSpec((h_pad, o_pad), lambda i, k: (0, 0)),  # w_lin
                pl.BlockSpec((1, o_pad), lambda i, k: (0, 0)),      # b_lin
            ],
            out_specs=pl.BlockSpec((n_tile, o_pad), lambda i, k: (i, 0)),
            scratch_shapes=[pltpu.VMEM((n_tile, f_pad), jnp.float32)],
        ),
        compiler_params=pltpu.CompilerParams(
            dimension_semantics=("parallel", "arbitrary"),
            vmem_limit_bytes=32 * 1024 * 1024,   # fits v7x's smaller VMEM too
        ),
        cost_estimate=pl.CostEstimate(flops=flops, transcendentals=0,
                                      bytes_accessed=bytes_accessed),
    )(src_pad, dst_pad, x_pad, wl_pad, bl_pad, wr_pad, wlin_pad, blin_pad)

    return {'book': out_full[:n, :out_ch]}


def reference(edge_index, x, w_l, b_l, w_r, w_lin, b_lin):
    """Pure-JAX reference matching PyG SAGEConv(mean) + relu + Linear."""
    n = x.shape[0]
    e = jnp.where(edge_index > n - 1, 0, edge_index)
    src, dst = e[0], e[1]
    msgs = x[src]                                                    # (E, F)
    summed = jax.ops.segment_sum(msgs, dst, num_segments=n)
    deg = jax.ops.segment_sum(jnp.ones(dst.shape, jnp.float32), dst,
                              num_segments=n)
    mean = summed / jnp.maximum(deg, 1.0)[:, None]
    h = jnp.maximum(mean @ w_l + b_l + x @ w_r, 0.0)
    return h @ w_lin + b_lin


if __name__ == "__main__":
    # NOTE: the module also declares SAGEConvs 'user_rates_book',
    # 'user_posted_comment', 'user_self_user', but the forward pass only ever
    # applies 'comment_comments_on_book'; only its parameters are materialized.
    N_COMMENT, F_IN, HIDDEN, OUT_CH, N_EDGES = 256, 8, 32, 4, 1000

    key = jax.random.PRNGKey(0)
    k1, k2, k3, k4, k5, k6, k7 = jax.random.split(key, 7)

    x_comment = jax.random.normal(k1, (N_COMMENT, F_IN), jnp.float32)
    # some indices intentionally exceed N_COMMENT-1 to exercise the clamp-to-0
    edge_index = jax.random.randint(k2, (2, N_EDGES), 0, N_COMMENT + 16,
                                    dtype=jnp.int32)

    # deterministic synthetic parameters (SAGEConv lin_l / lin_r + output Linear)
    w_l = jax.random.normal(k3, (F_IN, HIDDEN), jnp.float32) / jnp.sqrt(F_IN)
    b_l = jax.random.normal(k4, (1, HIDDEN), jnp.float32) * 0.01
    w_r = jax.random.normal(k5, (F_IN, HIDDEN), jnp.float32) / jnp.sqrt(F_IN)
    w_lin = jax.random.normal(k6, (HIDDEN, OUT_CH), jnp.float32) / jnp.sqrt(HIDDEN)
    b_lin = jax.random.normal(k7, (1, OUT_CH), jnp.float32) * 0.01

    out = hetero_gcn_forward(edge_index, x_comment, w_l, b_l, w_r, w_lin, b_lin)
    out = jax.block_until_ready(out)

    ref = reference(edge_index, x_comment, w_l, b_l, w_r, w_lin, b_lin)
    assert out['book'].shape == (N_COMMENT, OUT_CH)
    max_err = jnp.max(jnp.abs(out['book'] - ref))
    # bf16 MXU operands in the aggregation path -> ~1e-3 abs error vs f32 ref.
    assert jnp.allclose(out['book'], ref, atol=2e-2, rtol=2e-2), \
        f"Pallas kernel mismatch vs JAX reference (max abs err = {max_err})"
    print("KERNEL_OK")
</pallas_src>

<mosaic_0001>
module attributes {stable_mosaic.version = 11 : i64} {
  func.func @hetero_gcn_kernel(%arg0: i32, %arg1: i32, %arg2: memref<256x1xi32, #tpu.memory_space<vmem>>, %arg3: memref<1x256xi32, #tpu.memory_space<vmem>>, %arg4: memref<256x128xf32, #tpu.memory_space<vmem>>, %arg5: memref<128x128xf32, #tpu.memory_space<vmem>>, %arg6: memref<1x128xf32, #tpu.memory_space<vmem>>, %arg7: memref<128x128xf32, #tpu.memory_space<vmem>>, %arg8: memref<128x128xf32, #tpu.memory_space<vmem>>, %arg9: memref<1x128xf32, #tpu.memory_space<vmem>>, %arg10: memref<128x128xf32, #tpu.memory_space<vmem>>, %arg11: memref<128x128xf32, #tpu.memory_space<vmem>>) attributes {dimension_semantics = [#tpu.dimension_semantics<parallel>, #tpu.dimension_semantics<arbitrary>], iteration_bounds = array<i64: 2, 4>, scalar_prefetch = 0 : i64, scratch_operands = 1 : i64, tpu.core_type = #tpu.core_type<tc>, window_params = [{transform_indices = @transform_0, window_bounds = array<i64: 256, 1>}, {transform_indices = @transform_1, window_bounds = array<i64: 1, 256>}, {pipeline_mode = #tpu.pipeline_mode<synchronous>, transform_indices = @transform_2, window_bounds = array<i64: 256, 128>}, {pipeline_mode = #tpu.pipeline_mode<synchronous>, transform_indices = @transform_3, window_bounds = array<i64: 128, 128>}, {pipeline_mode = #tpu.pipeline_mode<synchronous>, transform_indices = @transform_4, window_bounds = array<i64: 1, 128>}, {pipeline_mode = #tpu.pipeline_mode<synchronous>, transform_indices = @transform_5, window_bounds = array<i64: 128, 128>}, {pipeline_mode = #tpu.pipeline_mode<synchronous>, transform_indices = @transform_6, window_bounds = array<i64: 128, 128>}, {pipeline_mode = #tpu.pipeline_mode<synchronous>, transform_indices = @transform_7, window_bounds = array<i64: 1, 128>}, {transform_indices = @transform_8, window_bounds = array<i64: 128, 128>}]} {
    %c0_i32 = arith.constant 0 : i32
    %0 = arith.cmpi eq, %arg1, %c0_i32 : i32
    %1 = arith.extui %0 : i1 to i32
    %c0_i32_0 = arith.constant 0 : i32
    %2 = arith.cmpi ne, %1, %c0_i32_0 : i32
    scf.if %2 {
      %cst_19 = arith.constant 0.000000e+00 : f32
      %42 = vector.broadcast %cst_19 : f32 to vector<128x128xf32>
      %c0_20 = arith.constant 0 : index
      %c0_21 = arith.constant 0 : index
      %43 = vector.load %arg11[%c0_20, %c0_21] : memref<128x128xf32, #tpu.memory_space<vmem>>, vector<128x128xf32>
      tpu.vector_store %arg11[%c0_20, %c0_21], %42 {strides = array<i32>} : memref<128x128xf32, #tpu.memory_space<vmem>>, vector<128x128xf32>,
    } else {
    }
    %c0 = arith.constant 0 : index
    %c0_1 = arith.constant 0 : index
    %3 = vector.load %arg2[%c0, %c0_1] : memref<256x1xi32, #tpu.memory_space<vmem>>, vector<256x1xi32>
    %c255_i32 = arith.constant 255 : i32
    %4 = vector.broadcast %c255_i32 : i32 to vector<256x1xi32>
    %5 = arith.cmpi sgt, %3, %4 : vector<256x1xi32>
    %c0_2 = arith.constant 0 : index
    %c0_3 = arith.constant 0 : index
    %6 = vector.load %arg2[%c0_2, %c0_3] : memref<256x1xi32, #tpu.memory_space<vmem>>, vector<256x1xi32>
    %c0_i32_4 = arith.constant 0 : i32
    %7 = vector.broadcast %c0_i32_4 : i32 to vector<256x1xi32>
    %8 = arith.select %5, %7, %6 : vector<256x1xi1>, vector<256x1xi32>
    %c0_5 = arith.constant 0 : index
    %c0_6 = arith.constant 0 : index
    %9 = vector.load %arg3[%c0_5, %c0_6] : memref<1x256xi32, #tpu.memory_space<vmem>>, vector<1x256xi32>
    %c255_i32_7 = arith.constant 255 : i32
    %10 = vector.broadcast %c255_i32_7 : i32 to vector<1x256xi32>
    %11 = arith.cmpi sgt, %9, %10 : vector<1x256xi32>
    %c0_8 = arith.constant 0 : index
    %c0_9 = arith.constant 0 : index
    %12 = vector.load %arg3[%c0_8, %c0_9] : memref<1x256xi32, #tpu.memory_space<vmem>>, vector<1x256xi32>
    %c0_i32_10 = arith.constant 0 : i32
    %13 = vector.broadcast %c0_i32_10 : i32 to vector<1x256xi32>
    %14 = arith.select %11, %13, %12 : vector<1x256xi1>, vector<1x256xi32>
    %15 = tpu.iota {dimensions = array<i32: 1>} : vector<256x256xi32>
    %16 = vector.broadcast %8 : vector<256x1xi32> to vector<256x256xi32>
    %17 = arith.cmpi eq, %15, %16 : vector<256x256xi32>
    %18 = arith.extui %17 : vector<256x256xi1> to vector<256x256xi32>
    %19 = arith.sitofp %18 : vector<256x256xi32> to vector<256x256xf32>
    %20 = arith.truncf %19 : vector<256x256xf32> to vector<256x256xbf16>
    %c0_11 = arith.constant 0 : index
    %c0_12 = arith.constant 0 : index
    %21 = vector.load %arg4[%c0_11, %c0_12] : memref<256x128xf32, #tpu.memory_space<vmem>>, vector<256x128xf32>
    %22 = arith.truncf %21 : vector<256x128xf32> to vector<256x128xbf16>
    %cst = arith.constant dense<0.000000e+00> : vector<256x128xf32>
    %23 = tpu.matmul %20, %22, %cst {dimension_numbers = #tpu.dot_dimension_numbers<[1], [0], [0], [1], [0, 0, 1, 1], [], []>} : vector<256x256xbf16>, vector<256x128xbf16>, vector<256x128xf32> -> vector<256x128xf32>
    %c128_i32 = arith.constant 128 : i32
    %24 = arith.muli %arg0, %c128_i32 : i32
    %25 = tpu.assume_multiple %24, 128 : i32
    %26 = tpu.iota {dimensions = array<i32: 0>} : vector<128x256xi32>
    %27 = vector.broadcast %25 : i32 to vector<128x256xi32>
    %28 = arith.addi %27, %26 : vector<128x256xi32>
    %29 = vector.broadcast %14 : vector<1x256xi32> to vector<128x256xi32>
    %30 = arith.cmpi eq, %28, %29 : vector<128x256xi32>
    %31 = arith.extui %30 : vector<128x256xi1> to vector<128x256xi32>
    %32 = arith.sitofp %31 : vector<128x256xi32> to vector<128x256xf32>
    %33 = arith.truncf %32 : vector<128x256xf32> to vector<128x256xbf16>
    %c0_13 = arith.constant 0 : index
    %c0_14 = arith.constant 0 : index
    %34 = vector.load %arg11[%c0_13, %c0_14] : memref<128x128xf32, #tpu.memory_space<vmem>>, vector<128x128xf32>
    %35 = arith.truncf %23 : vector<256x128xf32> to vector<256x128xbf16>
    %cst_15 = arith.constant dense<0.000000e+00> : vector<128x128xf32>
    %36 = tpu.matmul %33, %35, %cst_15 {dimension_numbers = #tpu.dot_dimension_numbers<[1], [0], [0], [1], [0, 0, 1, 1], [], []>} : vector<128x256xbf16>, vector<256x128xbf16>, vector<128x128xf32> -> vector<128x128xf32>
    %37 = arith.addf %34, %36 : vector<128x128xf32>
    %c0_16 = arith.constant 0 : index
    %c0_17 = arith.constant 0 : index
    %38 = vector.load %arg11[%c0_16, %c0_17] : memref<128x128xf32, #tpu.memory_space<vmem>>, vector<128x128xf32>
    tpu.vector_store %arg11[%c0_16, %c0_17], %37 {strides = array<i32>} : memref<128x128xf32, #tpu.memory_space<vmem>>, vector<128x128xf32>,
    %c3_i32 = arith.constant 3 : i32
    %39 = arith.cmpi eq, %arg1, %c3_i32 : i32
    %40 = arith.extui %39 : i1 to i32
    %c0_i32_18 = arith.constant 0 : i32
    %41 = arith.cmpi ne, %40, %c0_i32_18 : i32
    scf.if %41 {
      %c0_19 = arith.constant 0 : index
      %c0_20 = arith.constant 0 : index
      %42 = vector.load %arg11[%c0_19, %c0_20] : memref<128x128xf32, #tpu.memory_space<vmem>>, vector<128x128xf32>
      %43 = vector.extract_strided_slice %42 {offsets = [0, 127], sizes = [128, 1], strides = [1, 1]} : vector<128x128xf32> to vector<128x1xf32>
      %cst_21 = arith.constant 1.000000e+00 : f32
      %44 = vector.broadcast %cst_21 : f32 to vector<128x1xf32>
      %45 = arith.maximumf %43, %44 : vector<128x1xf32>
      %46 = tpu.reciprocal %45 : vector<128x1xf32> -> vector<128x1xf32>
      %47 = vector.broadcast %46 : vector<128x1xf32> to vector<128x128xf32>
      %48 = arith.mulf %42, %47 : vector<128x128xf32>
      %49 = arith.index_cast %25 : i32 to index
      %c0_22 = arith.constant 0 : index
      %50 = vector.load %arg4[%49, %c0_22] : memref<256x128xf32, #tpu.memory_space<vmem>>, vector<128x128xf32>
      %c0_23 = arith.constant 0 : index
      %c0_24 = arith.constant 0 : index
      %51 = vector.load %arg5[%c0_23, %c0_24] : memref<128x128xf32, #tpu.memory_space<vmem>>, vector<128x128xf32>
      %cst_25 = arith.constant dense<0.000000e+00> : vector<128x128xf32>
      %52 = tpu.matmul %48, %51, %cst_25 {dimension_numbers = #tpu.dot_dimension_numbers<[1], [0], [0], [1], [0, 0, 1, 1], [], []>} : vector<128x128xf32>, vector<128x128xf32>, vector<128x128xf32> -> vector<128x128xf32>
      %c0_26 = arith.constant 0 : index
      %c0_27 = arith.constant 0 : index
      %53 = vector.load %arg6[%c0_26, %c0_27] : memref<1x128xf32, #tpu.memory_space<vmem>>, vector<1x128xf32>
      %54 = vector.broadcast %53 : vector<1x128xf32> to vector<128x128xf32>
      %55 = arith.addf %52, %54 : vector<128x128xf32>
      %c0_28 = arith.constant 0 : index
      %c0_29 = arith.constant 0 : index
      %56 = vector.load %arg7[%c0_28, %c0_29] : memref<128x128xf32, #tpu.memory_space<vmem>>, vector<128x128xf32>
      %cst_30 = arith.constant dense<0.000000e+00> : vector<128x128xf32>
      %57 = tpu.matmul %50, %56, %cst_30 {dimension_numbers = #tpu.dot_dimension_numbers<[1], [0], [0], [1], [0, 0, 1, 1], [], []>} : vector<128x128xf32>, vector<128x128xf32>, vector<128x128xf32> -> vector<128x128xf32>
      %58 = arith.addf %55, %57 : vector<128x128xf32>
      %cst_31 = arith.constant 0.000000e+00 : f32
      %59 = vector.broadcast %cst_31 : f32 to vector<128x128xf32>
      %60 = arith.maximumf %58, %59 : vector<128x128xf32>
      %c0_32 = arith.constant 0 : index
      %c0_33 = arith.constant 0 : index
      %61 = vector.load %arg8[%c0_32, %c0_33] : memref<128x128xf32, #tpu.memory_space<vmem>>, vector<128x128xf32>
      %cst_34 = arith.constant dense<0.000000e+00> : vector<128x128xf32>
      %62 = tpu.matmul %60, %61, %cst_34 {dimension_numbers = #tpu.dot_dimension_numbers<[1], [0], [0], [1], [0, 0, 1, 1], [], []>} : vector<128x128xf32>, vector<128x128xf32>, vector<128x128xf32> -> vector<128x128xf32>
      %c0_35 = arith.constant 0 : index
      %c0_36 = arith.constant 0 : index
      %63 = vector.load %arg9[%c0_35, %c0_36] : memref<1x128xf32, #tpu.memory_space<vmem>>, vector<1x128xf32>
      %64 = vector.broadcast %63 : vector<1x128xf32> to vector<128x128xf32>
      %65 = arith.addf %62, %64 : vector<128x128xf32>
      %c0_37 = arith.constant 0 : index
      %c0_38 = arith.constant 0 : index
      %66 = vector.load %arg10[%c0_37, %c0_38] : memref<128x128xf32, #tpu.memory_space<vmem>>, vector<128x128xf32>
      tpu.vector_store %arg10[%c0_37, %c0_38], %65 {strides = array<i32>} : memref<128x128xf32, #tpu.memory_space<vmem>>, vector<128x128xf32>,
    } else {
    }
    return
  }
  func.func @transform_0(%arg0: i32, %arg1: i32) -> (i32, i32) {
    %c0_i32 = arith.constant 0 : i32
    %c0_i32_0 = arith.constant 0 : i32
    return %arg1, %c0_i32 : i32, i32
  }
  func.func @transform_1(%arg0: i32, %arg1: i32) -> (i32, i32) {
    %c0_i32 = arith.constant 0 : i32
    %c0_i32_0 = arith.constant 0 : i32
    return %c0_i32, %arg1 : i32, i32
  }
  func.func @transform_2(%arg0: i32, %arg1: i32) -> (i32, i32) {
    %c0_i32 = arith.constant 0 : i32
    %c0_i32_0 = arith.constant 0 : i32
    %c0_i32_1 = arith.constant 0 : i32
    return %c0_i32, %c0_i32_0 : i32, i32
  }
  func.func @transform_3(%arg0: i32, %arg1: i32) -> (i32, i32) {
    %c0_i32 = arith.constant 0 : i32
    %c0_i32_0 = arith.constant 0 : i32
    %c0_i32_1 = arith.constant 0 : i32
    return %c0_i32, %c0_i32_0 : i32, i32
  }
  func.func @transform_4(%arg0: i32, %arg1: i32) -> (i32, i32) {
    %c0_i32 = arith.constant 0 : i32
    %c0_i32_0 = arith.constant 0 : i32
    %c0_i32_1 = arith.constant 0 : i32
    return %c0_i32, %c0_i32_0 : i32, i32
  }
  func.func @transform_5(%arg0: i32, %arg1: i32) -> (i32, i32) {
    %c0_i32 = arith.constant 0 : i32
    %c0_i32_0 = arith.constant 0 : i32
    %c0_i32_1 = arith.constant 0 : i32
    return %c0_i32, %c0_i32_0 : i32, i32
  }
  func.func @transform_6(%arg0: i32, %arg1: i32) -> (i32, i32) {
    %c0_i32 = arith.constant 0 : i32
    %c0_i32_0 = arith.constant 0 : i32
    %c0_i32_1 = arith.constant 0 : i32
    return %c0_i32, %c0_i32_0 : i32, i32
  }
  func.func @transform_7(%arg0: i32, %arg1: i32) -> (i32, i32) {
    %c0_i32 = arith.constant 0 : i32
    %c0_i32_0 = arith.constant 0 : i32
    %c0_i32_1 = arith.constant 0 : i32
    return %c0_i32, %c0_i32_0 : i32, i32
  }
  func.func @transform_8(%arg0: i32, %arg1: i32) -> (i32, i32) {
    %c0_i32 = arith.constant 0 : i32
    %c0_i32_0 = arith.constant 0 : i32
    return %arg0, %c0_i32 : i32, i32
  }
}

</mosaic_0001>

<llo_original>
// kernel: hetero_gcn_forward.1
$region0: #{hetero_gcn_forward.1}
  #allocation0 [shape = 'u32[]', space=smem, size = 0x4, offset = 0x4, fixed_abs, tag = 'smem constant byte address 0x4 - core index']
  #allocation1 [shape = 'u32[144,128]{1,0:T(1,128)}', space=vmem, size = 0x12000, scoped, tag = 'internal scratch']
  #allocation2 [shape = 'f32[128,128]{1,0:T(8,128)}', space=vmem, size = 0x10000, scoped, tag = 'scratch operand']
  %s0 = inlined_call_operand.vmem [shape: s32[1024,1], index: 0, kind: input, shape index: {}]
  %s1 = inlined_call_operand.vmem [shape: s32[1,1024], index: 1, kind: input, shape index: {}]
  %s2 = inlined_call_operand.vmem [shape: f32[256,128], index: 2, kind: input, shape index: {}]
  %s3 = inlined_call_operand.vmem [shape: f32[128,128], index: 3, kind: input, shape index: {}]
  %s4 = inlined_call_operand.vmem [shape: f32[1,128], index: 4, kind: input, shape index: {}]
  %s5 = inlined_call_operand.vmem [shape: f32[128,128], index: 5, kind: input, shape index: {}]
  %s6 = inlined_call_operand.vmem [shape: f32[128,128], index: 6, kind: input, shape index: {}]
  %s7 = inlined_call_operand.vmem [shape: f32[1,128], index: 7, kind: input, shape index: {}]
  %s8 = inlined_call_operand.vmem [shape: f32[256,128], index: 8, kind: output, shape index: {}]
  %s9 = sld [smem:[#allocation0]]
  $region73: #{hetero_gcn_forward.1} parent=0
    _
  %s11 = ssub.s32 1, %s9
  %s12 = scalar_select 0, %s11, %s9
  loop: start=0, step=1, limit=10
  $region2: #{hetero_gcn_forward.1} parent=0 // loop_pre_header
    _
  $region3: #{hetero_gcn_forward.1} parent=0 // loop_header
    %s14 = sphi 0, %s18
    %p15 = scmp.ge.s32.totalorder %s14, 10
    %s21 = sphi 0, %s33
    %s22 = sphi 0, %s29
    %s23 = sphi 0, %s21
    %s24 = sphi 0, %s22
    %s25 = sphi 0, %s23
    %s26 = sphi 0, %s24
    %s36 = sphi 0, %s38
    %s39 = sphi 0, %s36
    %s40 = sphi 0, %s39
    %s56 = sphi 0, %s40
    %s62 = sphi 0, %s64
    %s65 = sphi 0, %s62
    %s66 = sphi 0, %s65
    %s82 = sphi 0, %s66
    %s86 = sphi 0, %s86
    %s88 = sphi 0, %s86
    %s89 = sphi 0, %s88
    %s103 = sphi 0, %s89
    %s107 = sphi 0, %s107
    %s109 = sphi 0, %s107
    %s110 = sphi 0, %s109
    %s124 = sphi 0, %s110
    %s128 = sphi 0, %s128
    %s130 = sphi 0, %s128
    %s131 = sphi 0, %s130
    %s145 = sphi 0, %s131
    %s149 = sphi 0, %s149
    %s151 = sphi 0, %s149
    %s152 = sphi 0, %s151
    %s166 = sphi 0, %s152
    %s170 = sphi 0, %s170
    %s172 = sphi 0, %s170
    %s173 = sphi 0, %s172
    %s187 = sphi 0, %s173
    %s191 = sphi 0, %s191
    %s193 = sphi 0, %s191
    %s194 = sphi 0, %s193
    %s208 = sphi 0, %s194
    %s214 = sphi 0, %s216
    %s217 = sphi 0, %s214
    %s218 = sphi 0, %s217
    %s234 = sphi 0, %s218
  $region4: #{hetero_gcn_forward.1} parent=0 // loop_header_branch
    %17 = sbr.rel (%p15) target = $region8
  $region5: #{hetero_gcn_forward.1} parent=0 // loop_body
    %s19 = ssub.s32 %s14, 1
    %s20 = ssub.s32 %s14, 2
    %s27 = sadd.s32 1, %s22
    %p28 = scmp.ge.s32.totalorder %s27, 4
    %s29 = scalar_select %p28, 0, %s27
    %s30 = sadd.s32 1, %s21
    %s31 = scalar_select %p28, %s30, %s21
    %p32 = scmp.ge.s32.totalorder %s31, 2
    %s33 = scalar_select %p32, 0, %s31
    %s34 = ssub.s32 %s22, %s29
    %p35 = scmp.eq.s32.totalorder %s34, 0
    %s37 = sadd.s32 %s36, 1
    %s38 = scalar_select %p35, %s36, %s37
    %p41 = pneg %p35
    %p42 = scmp.eq.s32.totalorder %s14, 7
    %p43 = por %p41, %p42
    %p44 = scmp.ne.s32.totalorder %s36, %s39
    %p45 = scmp.eq.s32.totalorder %s14, 0
    %p46 = por %p44, %p45
    %p47 = scmp.ne.s32.totalorder %s36, %s39
    %p48 = scmp.eq.s32.totalorder %s19, 7
    %p49 = por %p47, %p48
    %p50 = scmp.ne.s32.totalorder %s39, %s40
    %p51 = scmp.eq.s32.totalorder %s19, 0
    %p52 = por %p50, %p51
    %p53 = scmp.ne.s32.totalorder %s39, %s40
    %p54 = scmp.eq.s32.totalorder %s20, 7
    %p55 = por %p53, %p54
    %p57 = scmp.ne.s32.totalorder %s40, %s56
    %p58 = scmp.eq.s32.totalorder %s20, 0
    %p59 = por %p57, %p58
    %s60 = ssub.s32 %s22, %s29
    %p61 = scmp.eq.s32.totalorder %s60, 0
    %s63 = sadd.s32 %s62, 1
    %s64 = scalar_select %p61, %s62, %s63
    %p67 = pneg %p61
    %p68 = scmp.eq.s32.totalorder %s14, 7
    %p69 = por %p67, %p68
    %p70 = scmp.ne.s32.totalorder %s62, %s65
    %p71 = scmp.eq.s32.totalorder %s14, 0
    %p72 = por %p70, %p71
    %p73 = scmp.ne.s32.totalorder %s62, %s65
    %p74 = scmp.eq.s32.totalorder %s19, 7
    %p75 = por %p73, %p74
    %p76 = scmp.ne.s32.totalorder %s65, %s66
    %p77 = scmp.eq.s32.totalorder %s19, 0
    %p78 = por %p76, %p77
    %p79 = scmp.ne.s32.totalorder %s65, %s66
    %p80 = scmp.eq.s32.totalorder %s20, 7
    %p81 = por %p79, %p80
    %p83 = scmp.ne.s32.totalorder %s66, %s82
    %p84 = scmp.eq.s32.totalorder %s20, 0
    %p85 = por %p83, %p84
    %s87 = sadd.s32 %s86, 1
    %p90 = scmp.eq.s32.totalorder %s14, 7
    %p91 = scmp.ne.s32.totalorder %s86, %s88
    %p92 = scmp.eq.s32.totalorder %s14, 0
    %p93 = por %p91, %p92
    %p94 = scmp.ne.s32.totalorder %s86, %s88
    %p95 = scmp.eq.s32.totalorder %s19, 7
    %p96 = por %p94, %p95
    %p97 = scmp.ne.s32.totalorder %s88, %s89
    %p98 = scmp.eq.s32.totalorder %s19, 0
    %p99 = por %p97, %p98
    %p100 = scmp.ne.s32.totalorder %s88, %s89
    %p101 = scmp.eq.s32.totalorder %s20, 7
    %p102 = por %p100, %p101
    %p104 = scmp.ne.s32.totalorder %s89, %s103
    %p105 = scmp.eq.s32.totalorder %s20, 0
    %p106 = por %p104, %p105
    %s108 = sadd.s32 %s107, 1
    %p111 = scmp.eq.s32.totalorder %s14, 7
    %p112 = scmp.ne.s32.totalorder %s107, %s109
    %p113 = scmp.eq.s32.totalorder %s14, 0
    %p114 = por %p112, %p113
    %p115 = scmp.ne.s32.totalorder %s107, %s109
    %p116 = scmp.eq.s32.totalorder %s19, 7
    %p117 = por %p115, %p116
    %p118 = scmp.ne.s32.totalorder %s109, %s110
    %p119 = scmp.eq.s32.totalorder %s19, 0
    %p120 = por %p118, %p119
    %p121 = scmp.ne.s32.totalorder %s109, %s110
    %p122 = scmp.eq.s32.totalorder %s20, 7
    %p123 = por %p121, %p122
    %p125 = scmp.ne.s32.totalorder %s110, %s124
    %p126 = scmp.eq.s32.totalorder %s20, 0
    %p127 = por %p125, %p126
    %s129 = sadd.s32 %s128, 1
    %p132 = scmp.eq.s32.totalorder %s14, 7
    %p133 = scmp.ne.s32.totalorder %s128, %s130
    %p134 = scmp.eq.s32.totalorder %s14, 0
    %p135 = por %p133, %p134
    %p136 = scmp.ne.s32.totalorder %s128, %s130
    %p137 = scmp.eq.s32.totalorder %s19, 7
    %p138 = por %p136, %p137
    %p139 = scmp.ne.s32.totalorder %s130, %s131
    %p140 = scmp.eq.s32.totalorder %s19, 0
    %p141 = por %p139, %p140
    %p142 = scmp.ne.s32.totalorder %s130, %s131
    %p143 = scmp.eq.s32.totalorder %s20, 7
    %p144 = por %p142, %p143
    %p146 = scmp.ne.s32.totalorder %s131, %s145
    %p147 = scmp.eq.s32.totalorder %s20, 0
    %p148 = por %p146, %p147
    %s150 = sadd.s32 %s149, 1
    %p153 = scmp.eq.s32.totalorder %s14, 7
    %p154 = scmp.ne.s32.totalorder %s149, %s151
    %p155 = scmp.eq.s32.totalorder %s14, 0
    %p156 = por %p154, %p155
    %p157 = scmp.ne.s32.totalorder %s149, %s151
    %p158 = scmp.eq.s32.totalorder %s19, 7
    %p159 = por %p157, %p158
    %p160 = scmp.ne.s32.totalorder %s151, %s152
    %p161 = scmp.eq.s32.totalorder %s19, 0
    %p162 = por %p160, %p161
    %p163 = scmp.ne.s32.totalorder %s151, %s152
    %p164 = scmp.eq.s32.totalorder %s20, 7
    %p165 = por %p163, %p164
    %p167 = scmp.ne.s32.totalorder %s152, %s166
    %p168 = scmp.eq.s32.totalorder %s20, 0
    %p169 = por %p167, %p168
    %s171 = sadd.s32 %s170, 1
    %p174 = scmp.eq.s32.totalorder %s14, 7
    %p175 = scmp.ne.s32.totalorder %s170, %s172
    %p176 = scmp.eq.s32.totalorder %s14, 0
    %p177 = por %p175, %p176
    %p178 = scmp.ne.s32.totalorder %s170, %s172
    %p179 = scmp.eq.s32.totalorder %s19, 7
    %p180 = por %p178, %p179
    %p181 = scmp.ne.s32.totalorder %s172, %s173
    %p182 = scmp.eq.s32.totalorder %s19, 0
    %p183 = por %p181, %p182
    %p184 = scmp.ne.s32.totalorder %s172, %s173
    %p185 = scmp.eq.s32.totalorder %s20, 7
    %p186 = por %p184, %p185
    %p188 = scmp.ne.s32.totalorder %s173, %s187
    %p189 = scmp.eq.s32.totalorder %s20, 0
    %p190 = por %p188, %p189
    %s192 = sadd.s32 %s191, 1
    %p195 = scmp.eq.s32.totalorder %s14, 7
    %p196 = scmp.ne.s32.totalorder %s191, %s193
    %p197 = scmp.eq.s32.totalorder %s14, 0
    %p198 = por %p196, %p197
    %p199 = scmp.ne.s32.totalorder %s191, %s193
    %p200 = scmp.eq.s32.totalorder %s19, 7
    %p201 = por %p199, %p200
    %p202 = scmp.ne.s32.totalorder %s193, %s194
    %p203 = scmp.eq.s32.totalorder %s19, 0
    %p204 = por %p202, %p203
    %p205 = scmp.ne.s32.totalorder %s193, %s194
    %p206 = scmp.eq.s32.totalorder %s20, 7
    %p207 = por %p205, %p206
    %p209 = scmp.ne.s32.totalorder %s194, %s208
    %p210 = scmp.eq.s32.totalorder %s20, 0
    %p211 = por %p209, %p210
    %s212 = ssub.s32 %s21, %s33
    %p213 = scmp.eq.s32.totalorder %s212, 0
    %s215 = sadd.s32 %s214, 1
    %s216 = scalar_select %p213, %s214, %s215
    %p219 = pneg %p213
    %p220 = scmp.eq.s32.totalorder %s14, 7
    %p221 = por %p219, %p220
    %p222 = scmp.ne.s32.totalorder %s214, %s217
    %p223 = scmp.eq.s32.totalorder %s14, 0
    %p224 = por %p222, %p223
    %p225 = scmp.ne.s32.totalorder %s214, %s217
    %p226 = scmp.eq.s32.totalorder %s19, 7
    %p227 = por %p225, %p226
    %p228 = scmp.ne.s32.totalorder %s217, %s218
    %p229 = scmp.eq.s32.totalorder %s19, 0
    %p230 = por %p228, %p229
    %p231 = scmp.ne.s32.totalorder %s217, %s218
    %p232 = scmp.eq.s32.totalorder %s20, 7
    %p233 = por %p231, %p232
    %p235 = scmp.ne.s32.totalorder %s218, %s234
    %p236 = scmp.eq.s32.totalorder %s20, 0
    %p237 = por %p235, %p236
    %p238 = scmp.le.s32.totalorder 1, %s14
    %p239 = scmp.lt.s32.totalorder %s14, 9
    %p240 = pnand %p238, %p239
    %p241 = pneg %p240
    // Predicated region
    $region9: #{hetero_gcn_forward.1} parent=5 // pred_check
      _
    $region10: #{hetero_gcn_forward.1} parent=5 // pred_check_branch
      %243 = sbr.rel (%p240) target = $region12
    $region11: #{hetero_gcn_forward.1} parent=5 // pred_region
      %s244 = ssub.s32 %s14, 1
      // Predicated region
      $region13: #{hetero_gcn_forward.1} parent=11 // pred_check
        %p245 = pneg %p99
      $region14: #{hetero_gcn_forward.1} parent=11 // pred_check_branch
        %247 = sbr.rel (%p245) target = $region16
      $region15: #{hetero_gcn_forward.1} parent=11 // pred_region
        _
      $region16: #{hetero_gcn_forward.1} parent=11 // pred_fallthru
        _
      // Predicated region
      $region17: #{hetero_gcn_forward.1} parent=11 // pred_check
        %p248 = pneg %p120
      $region18: #{hetero_gcn_forward.1} parent=11 // pred_check_branch
        %250 = sbr.rel (%p248) target = $region20
      $region19: #{hetero_gcn_forward.1} parent=11 // pred_region
        _
      $region20: #{hetero_gcn_forward.1} parent=11 // pred_fallthru
        _
      // Predicated region
      $region21: #{hetero_gcn_forward.1} parent=11 // pred_check
        %p251 = pneg %p141
      $region22: #{hetero_gcn_forward.1} parent=11 // pred_check_branch
        %253 = sbr.rel (%p251) target = $region24
      $region23: #{hetero_gcn_forward.1} parent=11 // pred_region
        _
      $region24: #{hetero_gcn_forward.1} parent=11 // pred_fallthru
        _
      // Predicated region
      $region25: #{hetero_gcn_forward.1} parent=11 // pred_check
        %p254 = pneg %p162
      $region26: #{hetero_gcn_forward.1} parent=11 // pred_check_branch
        %256 = sbr.rel (%p254) target = $region28
      $region27: #{hetero_gcn_forward.1} parent=11 // pred_region
        _
      $region28: #{hetero_gcn_forward.1} parent=11 // pred_fallthru
        _
      // Predicated region
      $region29: #{hetero_gcn_forward.1} parent=11 // pred_check
        %p257 = pneg %p183
      $region30: #{hetero_gcn_forward.1} parent=11 // pred_check_branch
        %259 = sbr.rel (%p257) target = $region32
      $region31: #{hetero_gcn_forward.1} parent=11 // pred_region
        _
      $region32: #{hetero_gcn_forward.1} parent=11 // pred_fallthru
        _
      // Predicated region
      $region33: #{hetero_gcn_forward.1} parent=11 // pred_check
        %p260 = pneg %p204
      $region34: #{hetero_gcn_forward.1} parent=11 // pred_check_branch
        %262 = sbr.rel (%p260) target = $region36
      $region35: #{hetero_gcn_forward.1} parent=11 // pred_region
        _
      $region36: #{hetero_gcn_forward.1} parent=11 // pred_fallthru
        _
    $region12: #{hetero_gcn_forward.1} parent=5 // pred_fallthru
      _
    %p263 = scmp.lt.s32.totalorder %s14, 8
    // Predicated region
    $region37: #{hetero_gcn_forward.1} parent=5 // pred_check
      %p264 = pneg %p263
    $region38: #{hetero_gcn_forward.1} parent=5 // pred_check_branch
      %266 = sbr.rel (%p264) target = $region40
    $region39: #{hetero_gcn_forward.1} parent=5 // pred_region
      // Predicated region
      $region41: #{hetero_gcn_forward.1} parent=39 // pred_check
        %p267 = pneg %p46
      $region42: #{hetero_gcn_forward.1} parent=39 // pred_check_branch
        %269 = sbr.rel (%p267) target = $region44
      $region43: #{hetero_gcn_forward.1} parent=39 // pred_region
        %s270 = smul.u32 32, %s22
        %p271 = scmp.lt.s32.totalorder %s270, 127
        %s272 = scalar_select %p271, %s270, 127
        %s273 = smul.addr %s272, 8
        %s274 = scalar_lea.vmem %s0, %s273
        %s275 = smul.u32 32, %s22
      $region44: #{hetero_gcn_forward.1} parent=39 // pred_fallthru
        _
      // Predicated region
      $region45: #{hetero_gcn_forward.1} parent=39 // pred_check
        %p276 = pneg %p72
      $region46: #{hetero_gcn_forward.1} parent=39 // pred_check_branch
        %278 = sbr.rel (%p276) target = $region48
      $region47: #{hetero_gcn_forward.1} parent=39 // pred_region
        %s279 = smul.u32 2, %s22
        %p280 = scmp.lt.s32.totalorder %s279, 7
        %s281 = scalar_select %p280, %s279, 7
        %s282 = scalar_lea.vmem %s1, %s281
        %s283 = smul.u32 2, %s22
      $region48: #{hetero_gcn_forward.1} parent=39 // pred_fallthru
        _
    $region40: #{hetero_gcn_forward.1} parent=5 // pred_fallthru
      _
    %p284 = scmp.le.s32.totalorder 1, %s14
    %p285 = scmp.lt.s32.totalorder %s14, 9
    %p286 = pnand %p284, %p285
    %p287 = pneg %p286
    // Predicated region
    $region49: #{hetero_gcn_forward.1} parent=5 // pred_check
      _
    $region50: #{hetero_gcn_forward.1} parent=5 // pred_check_branch
      %289 = sbr.rel (%p286) target = $region52
    $region51: #{hetero_gcn_forward.1} parent=5 // pred_region
      %s290 = ssub.s32 %s14, 1
      %s291 = smul.u32 32, %s24
      %p292 = scmp.lt.s32.totalorder %s291, 127
      %s293 = scalar_select %p292, %s291, 127
      %s294 = smul.addr %s293, 8
      %s295 = scalar_lea.vmem %s0, %s294
      %p296 = pneg %p52
      %p297 = pneg %p49
      %s298 = smul.u32 2, %s24
      %p299 = scmp.lt.s32.totalorder %s298, 7
      %s300 = scalar_select %p299, %s298, 7
      %s301 = scalar_lea.vmem %s1, %s300
      %p302 = pneg %p78
      %p303 = pneg %p75
      %p304 = pneg %p99
      %p305 = pneg %p96
      %p306 = pneg %p120
      %p307 = pneg %p117
      %p308 = pneg %p141
      %p309 = pneg %p138
      %p310 = pneg %p162
      %p311 = pneg %p159
      %p312 = pneg %p183
      %p313 = pneg %p180
      %p314 = pneg %p204
      %p315 = pneg %p201
      %p316 = pneg %p230
      %p317 = pneg %p227
      %s318 = smul.u32 16, %s23
      %p319 = scmp.lt.s32.totalorder %s318, 31
      %s320 = scalar_select %p319, %s318, 31
      %s321 = smul.addr %s320, 8
      %s322 = scalar_lea.vmem %s8, %s321
      %s323 = smul.u32 32, %s24
      %p324 = scmp.lt.s32.totalorder %s323, 127
      %s325 = scalar_select %p324, %s323, 127
      %s326 = smul.addr %s325, 8
      %s327 = scalar_lea.vmem %s0, %s326
      %s328 = smul.u32 32, %s24
      %s329 = smul.u32 2, %s24
      %p330 = scmp.lt.s32.totalorder %s329, 7
      %s331 = scalar_select %p330, %s329, 7
      %s332 = scalar_lea.vmem %s1, %s331
      %s333 = smul.u32 2, %s24
      %s334 = smul.u32 16, %s23
      %p335 = scmp.lt.s32.totalorder %s334, 31
      %s336 = scalar_select %p335, %s334, 31
      %s337 = smul.addr %s336, 8
      %s338 = scalar_lea.vmem %s8, %s337
      %s339 = smul.u32 16, %s23
      %p341 = scmp.eq.s32.totalorder %s24, 0
      // Predicated region
      $region53: #{hetero_gcn_forward.1} parent=51 // pred_check
        %p342 = pneg %p341
      $region54: #{hetero_gcn_forward.1} parent=51 // pred_check_branch
        %344 = sbr.rel (%p342) target = $region56
      $region55: #{hetero_gcn_forward.1} parent=51 // pred_region
        %345 = vst [vmem:[#allocation2] sm:$0xff] 0.0
        %346 = vst [vmem:[#allocation2 + $0x8] sm:$0xff] 0.0
        %347 = vst [vmem:[#allocation2 + $0x10] sm:$0xff] 0.0
        %348 = vst [vmem:[#allocation2 + $0x18] sm:$0xff] 0.0
        %349 = vst [vmem:[#allocation2 + $0x20] sm:$0xff] 0.0
        %350 = vst [vmem:[#allocation2 + $0x28] sm:$0xff] 0.0
        %351 = vst [vmem:[#allocation2 + $0x30] sm:$0xff] 0.0
        %352 = vst [vmem:[#allocation2 + $0x38] sm:$0xff] 0.0
        %353 = vst [vmem:[#allocation2 + $0x40] sm:$0xff] 0.0
        %354 = vst [vmem:[#allocation2 + $0x48] sm:$0xff] 0.0
        %355 = vst [vmem:[#allocation2 + $0x50] sm:$0xff] 0.0
        %356 = vst [vmem:[#allocation2 + $0x58] sm:$0xff] 0.0
        %357 = vst [vmem:[#allocation2 + $0x60] sm:$0xff] 0.0
        %358 = vst [vmem:[#allocation2 + $0x68] sm:$0xff] 0.0
        %359 = vst [vmem:[#allocation2 + $0x70] sm:$0xff] 0.0
        %360 = vst [vmem:[#allocation2 + $0x78] sm:$0xff] 0.0
      $region56: #{hetero_gcn_forward.1} parent=51 // pred_fallthru
        _
      %v361 = vld [vmem:[%s327] sm:$0xff]
      %v362 = vld [vmem:[%s327 + $0x8] sm:$0xff]
      %v363 = vld [vmem:[%s327 + $0x10] sm:$0xff]
      %v364 = vld [vmem:[%s327 + $0x18] sm:$0xff]
      %v365 = vld [vmem:[%s327 + $0x20] sm:$0xff]
      %v366 = vld [vmem:[%s327 + $0x28] sm:$0xff]
      %v367 = vld [vmem:[%s327 + $0x30] sm:$0xff]
      %v368 = vld [vmem:[%s327 + $0x38] sm:$0xff]
      %v369 = vld [vmem:[%s327 + $0x40] sm:$0xff]
      %v370 = vld [vmem:[%s327 + $0x48] sm:$0xff]
      %v371 = vld [vmem:[%s327 + $0x50] sm:$0xff]
      %v372 = vld [vmem:[%s327 + $0x58] sm:$0xff]
      %v373 = vld [vmem:[%s327 + $0x60] sm:$0xff]
      %v374 = vld [vmem:[%s327 + $0x68] sm:$0xff]
      %v375 = vld [vmem:[%s327 + $0x70] sm:$0xff]
      %v376 = vld [vmem:[%s327 + $0x78] sm:$0xff]
      %v377 = vld [vmem:[%s327 + $0x80] sm:$0xff]
      %v378 = vld [vmem:[%s327 + $0x88] sm:$0xff]
      %v379 = vld [vmem:[%s327 + $0x90] sm:$0xff]
      %v380 = vld [vmem:[%s327 + $0x98] sm:$0xff]
      %v381 = vld [vmem:[%s327 + $0xa0] sm:$0xff]
      %v382 = vld [vmem:[%s327 + $0xa8] sm:$0xff]
      %v383 = vld [vmem:[%s327 + $0xb0] sm:$0xff]
      %v384 = vld [vmem:[%s327 + $0xb8] sm:$0xff]
      %v385 = vld [vmem:[%s327 + $0xc0] sm:$0xff]
      %v386 = vld [vmem:[%s327 + $0xc8] sm:$0xff]
      %v387 = vld [vmem:[%s327 + $0xd0] sm:$0xff]
      %v388 = vld [vmem:[%s327 + $0xd8] sm:$0xff]
      %v389 = vld [vmem:[%s327 + $0xe0] sm:$0xff]
      %v390 = vld [vmem:[%s327 + $0xe8] sm:$0xff]
      %v391 = vld [vmem:[%s327 + $0xf0] sm:$0xff]
      %v392 = vld [vmem:[%s327 + $0xf8] sm:$0xff]
      %vm393 = vcmp.gt.s32.totalorder %v361, 255
      %vm394 = vcmp.gt.s32.totalorder %v362, 255
      %vm395 = vcmp.gt.s32.totalorder %v363, 255
      %vm396 = vcmp.gt.s32.totalorder %v364, 255
      %vm397 = vcmp.gt.s32.totalorder %v365, 255
      %vm398 = vcmp.gt.s32.totalorder %v366, 255
      %vm399 = vcmp.gt.s32.totalorder %v367, 255
      %vm400 = vcmp.gt.s32.totalorder %v368, 255
      %vm401 = vcmp.gt.s32.totalorder %v369, 255
      %vm402 = vcmp.gt.s32.totalorder %v370, 255
      %vm403 = vcmp.gt.s32.totalorder %v371, 255
      %vm404 = vcmp.gt.s32.totalorder %v372, 255
      %vm405 = vcmp.gt.s32.totalorder %v373, 255
      %vm406 = vcmp.gt.s32.totalorder %v374, 255
      %vm407 = vcmp.gt.s32.totalorder %v375, 255
      %vm408 = vcmp.gt.s32.totalorder %v376, 255
      %vm409 = vcmp.gt.s32.totalorder %v377, 255
      %vm410 = vcmp.gt.s32.totalorder %v378, 255
      %vm411 = vcmp.gt.s32.totalorder %v379, 255
      %vm412 = vcmp.gt.s32.totalorder %v380, 255
      %vm413 = vcmp.gt.s32.totalorder %v381, 255
      %vm414 = vcmp.gt.s32.totalorder %v382, 255
      %vm415 = vcmp.gt.s32.totalorder %v383, 255
      %vm416 = vcmp.gt.s32.totalorder %v384, 255
      %vm417 = vcmp.gt.s32.totalorder %v385, 255
      %vm418 = vcmp.gt.s32.totalorder %v386, 255
      %vm419 = vcmp.gt.s32.totalorder %v387, 255
      %vm420 = vcmp.gt.s32.totalorder %v388, 255
      %vm421 = vcmp.gt.s32.totalorder %v389, 255
      %vm422 = vcmp.gt.s32.totalorder %v390, 255
      %vm423 = vcmp.gt.s32.totalorder %v391, 255
      %vm424 = vcmp.gt.s32.totalorder %v392, 255
      %v425 = vsel %vm393, 0, %v361
      %v426 = vsel %vm394, 0, %v362
      %v427 = vsel %vm395, 0, %v363
      %v428 = vsel %vm396, 0, %v364
      %v429 = vsel %vm397, 0, %v365
      %v430 = vsel %vm398, 0, %v366
      %v431 = vsel %vm399, 0, %v367
      %v432 = vsel %vm400, 0, %v368
      %v433 = vsel %vm401, 0, %v369
      %v434 = vsel %vm402, 0, %v370
      %v435 = vsel %vm403, 0, %v371
      %v436 = vsel %vm404, 0, %v372
      %v437 = vsel %vm405, 0, %v373
      %v438 = vsel %vm406, 0, %v374
      %v439 = vsel %vm407, 0, %v375
      %v440 = vsel %vm408, 0, %v376
      %v441 = vsel %vm409, 0, %v377
      %v442 = vsel %vm410, 0, %v378
      %v443 = vsel %vm411, 0, %v379
      %v444 = vsel %vm412, 0, %v380
      %v445 = vsel %vm413, 0, %v381
      %v446 = vsel %vm414, 0, %v382
      %v447 = vsel %vm415, 0, %v383
      %v448 = vsel %vm416, 0, %v384
      %v449 = vsel %vm417, 0, %v385
      %v450 = vsel %vm418, 0, %v386
      %v451 = vsel %vm419, 0, %v387
      %v452 = vsel %vm420, 0, %v388
      %v453 = vsel %vm421, 0, %v389
      %v454 = vsel %vm422, 0, %v390
      %v455 = vsel %vm423, 0, %v391
      %v456 = vsel %vm424, 0, %v392
      %v457 = vld [vmem:[%s332] sm:$0x3]
      %vm458 = vcmp.gt.s32.totalorder %v457, 255
      %v459 = vsel %vm458, 0, %v457
      %v460 = vlaneseq
      %v461 = vand.u32 %v460, 127
      %v462 = vadd.s32 %v461, 128
      %463 = vset.pattern.permute.xlu0 0
      %464 = vperm.xlu0 %463, %v425
      %v465 = vpop.permute.xlu0 %464
      %466 = vset.pattern.permute.xlu0 0
      %467 = vperm.xlu0 %466, %v426
      %v468 = vpop.permute.xlu0 %467
      %469 = vset.pattern.permute.xlu0 0
      %470 = vperm.xlu0 %469, %v427
      %v471 = vpop.permute.xlu0 %470
      %472 = vset.pattern.permute.xlu0 0
      %473 = vperm.xlu0 %472, %v428
      %v474 = vpop.permute.xlu0 %473
      %475 = vset.pattern.permute.xlu0 0
      %476 = vperm.xlu0 %475, %v429
      %v477 = vpop.permute.xlu0 %476
      %478 = vset.pattern.permute.xlu0 0
      %479 = vperm.xlu0 %478, %v430
      %v480 = vpop.permute.xlu0 %479
      %481 = vset.pattern.permute.xlu0 0
      %482 = vperm.xlu0 %481, %v431
      %v483 = vpop.permute.xlu0 %482
      %484 = vset.pattern.permute.xlu0 0
      %485 = vperm.xlu0 %484, %v432
      %v486 = vpop.permute.xlu0 %485
      %487 = vset.pattern.permute.xlu0 0
      %488 = vperm.xlu0 %487, %v433
      %v489 = vpop.permute.xlu0 %488
      %490 = vset.pattern.permute.xlu0 0
      %491 = vperm.xlu0 %490, %v434
      %v492 = vpop.permute.xlu0 %491
      %493 = vset.pattern.permute.xlu0 0
      %494 = vperm.xlu0 %493, %v435
      %v495 = vpop.permute.xlu0 %494
      %496 = vset.pattern.permute.xlu0 0
      %497 = vperm.xlu0 %496, %v436
      %v498 = vpop.permute.xlu0 %497
      %499 = vset.pattern.permute.xlu0 0
      %500 = vperm.xlu0 %499, %v437
      %v501 = vpop.permute.xlu0 %500
      %502 = vset.pattern.permute.xlu0 0
      %503 = vperm.xlu0 %502, %v438
      %v504 = vpop.permute.xlu0 %503
      %505 = vset.pattern.permute.xlu0 0
      %506 = vperm.xlu0 %505, %v439
      %v507 = vpop.permute.xlu0 %506
      %508 = vset.pattern.permute.xlu0 0
      %509 = vperm.xlu0 %508, %v440
      %v510 = vpop.permute.xlu0 %509
      %511 = vset.pattern.permute.xlu0 0
      %512 = vperm.xlu0 %511, %v441
      %v513 = vpop.permute.xlu0 %512
      %514 = vset.pattern.permute.xlu0 0
      %515 = vperm.xlu0 %514, %v442
      %v516 = vpop.permute.xlu0 %515
      %517 = vset.pattern.permute.xlu0 0
      %518 = vperm.xlu0 %517, %v443
      %v519 = vpop.permute.xlu0 %518
      %520 = vset.pattern.permute.xlu0 0
      %521 = vperm.xlu0 %520, %v444
      %v522 = vpop.permute.xlu0 %521
      %523 = vset.pattern.permute.xlu0 0
      %524 = vperm.xlu0 %523, %v445
      %v525 = vpop.permute.xlu0 %524
      %526 = vset.pattern.permute.xlu0 0
      %527 = vperm.xlu0 %526, %v446
      %v528 = vpop.permute.xlu0 %527
      %529 = vset.pattern.permute.xlu0 0
      %530 = vperm.xlu0 %529, %v447
      %v531 = vpop.permute.xlu0 %530
      %532 = vset.pattern.permute.xlu0 0
      %533 = vperm.xlu0 %532, %v448
      %v534 = vpop.permute.xlu0 %533
      %535 = vset.pattern.permute.xlu0 0
      %536 = vperm.xlu0 %535, %v449
      %v537 = vpop.permute.xlu0 %536
      %538 = vset.pattern.permute.xlu0 0
      %539 = vperm.xlu0 %538, %v450
      %v540 = vpop.permute.xlu0 %539
      %541 = vset.pattern.permute.xlu0 0
      %542 = vperm.xlu0 %541, %v451
      %v543 = vpop.permute.xlu0 %542
      %544 = vset.pattern.permute.xlu0 0
      %545 = vperm.xlu0 %544, %v452
      %v546 = vpop.permute.xlu0 %545
      %547 = vset.pattern.permute.xlu0 0
      %548 = vperm.xlu0 %547, %v453
      %v549 = vpop.permute.xlu0 %548
      %550 = vset.pattern.permute.xlu0 0
      %551 = vperm.xlu0 %550, %v454
      %v552 = vpop.permute.xlu0 %551
      %553 = vset.pattern.permute.xlu0 0
      %554 = vperm.xlu0 %553, %v455
      %v555 = vpop.permute.xlu0 %554
      %556 = vset.pattern.permute.xlu0 0
      %557 = vperm.xlu0 %556, %v456
      %v558 = vpop.permute.xlu0 %557
      %vm559 = vcmp.eq.s32.totalorder %v461, %v465
      %vm560 = vcmp.eq.s32.totalorder %v462, %v465
      %vm561 = vcmp.eq.s32.totalorder %v461, %v468
      %vm562 = vcmp.eq.s32.totalorder %v462, %v468
      %vm563 = vcmp.eq.s32.totalorder %v461, %v471
      %vm564 = vcmp.eq.s32.totalorder %v462, %v471
      %vm565 = vcmp.eq.s32.totalorder %v461, %v474
      %vm566 = vcmp.eq.s32.totalorder %v462, %v474
      %vm567 = vcmp.eq.s32.totalorder %v461, %v477
      %vm568 = vcmp.eq.s32.totalorder %v462, %v477
      %vm569 = vcmp.eq.s32.totalorder %v461, %v480
      %vm570 = vcmp.eq.s32.totalorder %v462, %v480
      %vm571 = vcmp.eq.s32.totalorder %v461, %v483
      %vm572 = vcmp.eq.s32.totalorder %v462, %v483
      %vm573 = vcmp.eq.s32.totalorder %v461, %v486
      %vm574 = vcmp.eq.s32.totalorder %v462, %v486
      %vm575 = vcmp.eq.s32.totalorder %v461, %v489
      %vm576 = vcmp.eq.s32.totalorder %v462, %v489
      %vm577 = vcmp.eq.s32.totalorder %v461, %v492
      %vm578 = vcmp.eq.s32.totalorder %v462, %v492
      %vm579 = vcmp.eq.s32.totalorder %v461, %v495
      %vm580 = vcmp.eq.s32.totalorder %v462, %v495
      %vm581 = vcmp.eq.s32.totalorder %v461, %v498
      %vm582 = vcmp.eq.s32.totalorder %v462, %v498
      %vm583 = vcmp.eq.s32.totalorder %v461, %v501
      %vm584 = vcmp.eq.s32.totalorder %v462, %v501
      %vm585 = vcmp.eq.s32.totalorder %v461, %v504
      %vm586 = vcmp.eq.s32.totalorder %v462, %v504
      %vm587 = vcmp.eq.s32.totalorder %v461, %v507
      %vm588 = vcmp.eq.s32.totalorder %v462, %v507
      %vm589 = vcmp.eq.s32.totalorder %v461, %v510
      %vm590 = vcmp.eq.s32.totalorder %v462, %v510
      %vm591 = vcmp.eq.s32.totalorder %v461, %v513
      %vm592 = vcmp.eq.s32.totalorder %v462, %v513
      %vm593 = vcmp.eq.s32.totalorder %v461, %v516
      %vm594 = vcmp.eq.s32.totalorder %v462, %v516
      %vm595 = vcmp.eq.s32.totalorder %v461, %v519
      %vm596 = vcmp.eq.s32.totalorder %v462, %v519
      %vm597 = vcmp.eq.s32.totalorder %v461, %v522
      %vm598 = vcmp.eq.s32.totalorder %v462, %v522
      %vm599 = vcmp.eq.s32.totalorder %v461, %v525
      %vm600 = vcmp.eq.s32.totalorder %v462, %v525
      %vm601 = vcmp.eq.s32.totalorder %v461, %v528
      %vm602 = vcmp.eq.s32.totalorder %v462, %v528
      %vm603 = vcmp.eq.s32.totalorder %v461, %v531
      %vm604 = vcmp.eq.s32.totalorder %v462, %v531
      %vm605 = vcmp.eq.s32.totalorder %v461, %v534
      %vm606 = vcmp.eq.s32.totalorder %v462, %v534
      %vm607 = vcmp.eq.s32.totalorder %v461, %v537
      %vm608 = vcmp.eq.s32.totalorder %v462, %v537
      %vm609 = vcmp.eq.s32.totalorder %v461, %v540
      %vm610 = vcmp.eq.s32.totalorder %v462, %v540
      %vm611 = vcmp.eq.s32.totalorder %v461, %v543
      %vm612 = vcmp.eq.s32.totalorder %v462, %v543
      %vm613 = vcmp.eq.s32.totalorder %v461, %v546
      %vm614 = vcmp.eq.s32.totalorder %v462, %v546
      %vm615 = vcmp.eq.s32.totalorder %v461, %v549
      %vm616 = vcmp.eq.s32.totalorder %v462, %v549
      %vm617 = vcmp.eq.s32.totalorder %v461, %v552
      %vm618 = vcmp.eq.s32.totalorder %v462, %v552
      %vm619 = vcmp.eq.s32.totalorder %v461, %v555
      %vm620 = vcmp.eq.s32.totalorder %v462, %v555
      %vm621 = vcmp.eq.s32.totalorder %v461, %v558
      %vm622 = vcmp.eq.s32.totalorder %v462, %v558
      %v623 = vsel %vm559, 1, 0
      %v624 = vsel %vm560, 1, 0
      %v625 = vsel %vm561, 1, 0
      %v626 = vsel %vm562, 1, 0
      %v627 = vsel %vm563, 1, 0
      %v628 = vsel %vm564, 1, 0
      %v629 = vsel %vm565, 1, 0
      %v630 = vsel %vm566, 1, 0
      %v631 = vsel %vm567, 1, 0
      %v632 = vsel %vm568, 1, 0
      %v633 = vsel %vm569, 1, 0
      %v634 = vsel %vm570, 1, 0
      %v635 = vsel %vm571, 1, 0
      %v636 = vsel %vm572, 1, 0
      %v637 = vsel %vm573, 1, 0
      %v638 = vsel %vm574, 1, 0
      %v639 = vsel %vm575, 1, 0
      %v640 = vsel %vm576, 1, 0
      %v641 = vsel %vm577, 1, 0
      %v642 = vsel %vm578, 1, 0
      %v643 = vsel %vm579, 1, 0
      %v644 = vsel %vm580, 1, 0
      %v645 = vsel %vm581, 1, 0
      %v646 = vsel %vm582, 1, 0
      %v647 = vsel %vm583, 1, 0
      %v648 = vsel %vm584, 1, 0
      %v649 = vsel %vm585, 1, 0
      %v650 = vsel %vm586, 1, 0
      %v651 = vsel %vm587, 1, 0
      %v652 = vsel %vm588, 1, 0
      %v653 = vsel %vm589, 1, 0
      %v654 = vsel %vm590, 1, 0
      %v655 = vsel %vm591, 1, 0
      %v656 = vsel %vm592, 1, 0
      %v657 = vsel %vm593, 1, 0
      %v658 = vsel %vm594, 1, 0
      %v659 = vsel %vm595, 1, 0
      %v660 = vsel %vm596, 1, 0
      %v661 = vsel %vm597, 1, 0
      %v662 = vsel %vm598, 1, 0
      %v663 = vsel %vm599, 1, 0
      %v664 = vsel %vm600, 1, 0
      %v665 = vsel %vm601, 1, 0
      %v666 = vsel %vm602, 1, 0
      %v667 = vsel %vm603, 1, 0
      %v668 = vsel %vm604, 1, 0
      %v669 = vsel %vm605, 1, 0
      %v670 = vsel %vm606, 1, 0
      %v671 = vsel %vm607, 1, 0
      %v672 = vsel %vm608, 1, 0
      %v673 = vsel %vm609, 1, 0
      %v674 = vsel %vm610, 1, 0
      %v675 = vsel %vm611, 1, 0
      %v676 = vsel %vm612, 1, 0
      %v677 = vsel %vm613, 1, 0
      %v678 = vsel %vm614, 1, 0
      %v679 = vsel %vm615, 1, 0
      %v680 = vsel %vm616, 1, 0
      %v681 = vsel %vm617, 1, 0
      %v682 = vsel %vm618, 1, 0
      %v683 = vsel %vm619, 1, 0
      %v684 = vsel %vm620, 1, 0
      %v685 = vsel %vm621, 1, 0
      %v686 = vsel %vm622, 1, 0
      %v687 = vcvt.s32.f32 %v623
      %v688 = vcvt.s32.f32 %v624
      %v689 = vcvt.s32.f32 %v625
      %v690 = vcvt.s32.f32 %v626
      %v691 = vcvt.s32.f32 %v627
      %v692 = vcvt.s32.f32 %v628
      %v693 = vcvt.s32.f32 %v629
      %v694 = vcvt.s32.f32 %v630
      %v695 = vcvt.s32.f32 %v631
      %v696 = vcvt.s32.f32 %v632
      %v697 = vcvt.s32.f32 %v633
      %v698 = vcvt.s32.f32 %v634
      %v699 = vcvt.s32.f32 %v635
      %v700 = vcvt.s32.f32 %v636
      %v701 = vcvt.s32.f32 %v637
      %v702 = vcvt.s32.f32 %v638
      %v703 = vcvt.s32.f32 %v639
      %v704 = vcvt.s32.f32 %v640
      %v705 = vcvt.s32.f32 %v641
      %v706 = vcvt.s32.f32 %v642
      %v707 = vcvt.s32.f32 %v643
      %v708 = vcvt.s32.f32 %v644
      %v709 = vcvt.s32.f32 %v645
      %v710 = vcvt.s32.f32 %v646
      %v711 = vcvt.s32.f32 %v647
      %v712 = vcvt.s32.f32 %v648
      %v713 = vcvt.s32.f32 %v649
      %v714 = vcvt.s32.f32 %v650
      %v715 = vcvt.s32.f32 %v651
      %v716 = vcvt.s32.f32 %v652
      %v717 = vcvt.s32.f32 %v653
      %v718 = vcvt.s32.f32 %v654
      %v719 = vcvt.s32.f32 %v655
      %v720 = vcvt.s32.f32 %v656
      %v721 = vcvt.s32.f32 %v657
      %v722 = vcvt.s32.f32 %v658
      %v723 = vcvt.s32.f32 %v659
      %v724 = vcvt.s32.f32 %v660
      %v725 = vcvt.s32.f32 %v661
      %v726 = vcvt.s32.f32 %v662
      %v727 = vcvt.s32.f32 %v663
      %v728 = vcvt.s32.f32 %v664
      %v729 = vcvt.s32.f32 %v665
      %v730 = vcvt.s32.f32 %v666
      %v731 = vcvt.s32.f32 %v667
      %v732 = vcvt.s32.f32 %v668
      %v733 = vcvt.s32.f32 %v669
      %v734 = vcvt.s32.f32 %v670
      %v735 = vcvt.s32.f32 %v671
      %v736 = vcvt.s32.f32 %v672
      %v737 = vcvt.s32.f32 %v673
      %v738 = vcvt.s32.f32 %v674
      %v739 = vcvt.s32.f32 %v675
      %v740 = vcvt.s32.f32 %v676
      %v741 = vcvt.s32.f32 %v677
      %v742 = vcvt.s32.f32 %v678
      %v743 = vcvt.s32.f32 %v679
      %v744 = vcvt.s32.f32 %v680
      %v745 = vcvt.s32.f32 %v681
      %v746 = vcvt.s32.f32 %v682
      %v747 = vcvt.s32.f32 %v683
      %v748 = vcvt.s32.f32 %v684
      %v749 = vcvt.s32.f32 %v685
      %v750 = vcvt.s32.f32 %v686
      %v751 = vpack.c.bf16 %v689, %v687
      %v752 = vpack.c.bf16 %v690, %v688
      %v753 = vpack.c.bf16 %v693, %v691
      %v754 = vpack.c.bf16 %v694, %v692
      %v755 = vpack.c.bf16 %v697, %v695
      %v756 = vpack.c.bf16 %v698, %v696
      %v757 = vpack.c.bf16 %v701, %v699
      %v758 = vpack.c.bf16 %v702, %v700
      %v759 = vpack.c.bf16 %v705, %v703
      %v760 = vpack.c.bf16 %v706, %v704
      %v761 = vpack.c.bf16 %v709, %v707
      %v762 = vpack.c.bf16 %v710, %v708
      %v763 = vpack.c.bf16 %v713, %v711
      %v764 = vpack.c.bf16 %v714, %v712
      %v765 = vpack.c.bf16 %v717, %v715
      %v766 = vpack.c.bf16 %v718, %v716
      %v767 = vpack.c.bf16 %v721, %v719
      %v768 = vpack.c.bf16 %v722, %v720
      %v769 = vpack.c.bf16 %v725, %v723
      %v770 = vpack.c.bf16 %v726, %v724
      %v771 = vpack.c.bf16 %v729, %v727
      %v772 = vpack.c.bf16 %v730, %v728
      %v773 = vpack.c.bf16 %v733, %v731
      %v774 = vpack.c.bf16 %v734, %v732
      %v775 = vpack.c.bf16 %v737, %v735
      %v776 = vpack.c.bf16 %v738, %v736
      %v777 = vpack.c.bf16 %v741, %v739
      %v778 = vpack.c.bf16 %v742, %v740
      %v779 = vpack.c.bf16 %v745, %v743
      %v780 = vpack.c.bf16 %v746, %v744
      %v781 = vpack.c.bf16 %v749, %v747
      %v782 = vpack.c.bf16 %v750, %v748
      %v783 = vld [vmem:[%s2] sm:$0xff]
      %v784 = vld [vmem:[%s2 + $0x8] sm:$0xff]
      %v785 = vld [vmem:[%s2 + $0x10] sm:$0xff]
      %v786 = vld [vmem:[%s2 + $0x18] sm:$0xff]
      %v787 = vld [vmem:[%s2 + $0x20] sm:$0xff]
      %v788 = vld [vmem:[%s2 + $0x28] sm:$0xff]
      %v789 = vld [vmem:[%s2 + $0x30] sm:$0xff]
      %v790 = vld [vmem:[%s2 + $0x38] sm:$0xff]
      %v791 = vld [vmem:[%s2 + $0x40] sm:$0xff]
      %v792 = vld [vmem:[%s2 + $0x48] sm:$0xff]
      %v793 = vld [vmem:[%s2 + $0x50] sm:$0xff]
      %v794 = vld [vmem:[%s2 + $0x58] sm:$0xff]
      %v795 = vld [vmem:[%s2 + $0x60] sm:$0xff]
      %v796 = vld [vmem:[%s2 + $0x68] sm:$0xff]
      %v797 = vld [vmem:[%s2 + $0x70] sm:$0xff]
      %v798 = vld [vmem:[%s2 + $0x78] sm:$0xff]
      %v799 = vld [vmem:[%s2 + $0x80] sm:$0xff]
      %v800 = vld [vmem:[%s2 + $0x88] sm:$0xff]
      %v801 = vld [vmem:[%s2 + $0x90] sm:$0xff]
      %v802 = vld [vmem:[%s2 + $0x98] sm:$0xff]
      %v803 = vld [vmem:[%s2 + $0xa0] sm:$0xff]
      %v804 = vld [vmem:[%s2 + $0xa8] sm:$0xff]
      %v805 = vld [vmem:[%s2 + $0xb0] sm:$0xff]
      %v806 = vld [vmem:[%s2 + $0xb8] sm:$0xff]
      %v807 = vld [vmem:[%s2 + $0xc0] sm:$0xff]
      %v808 = vld [vmem:[%s2 + $0xc8] sm:$0xff]
      %v809 = vld [vmem:[%s2 + $0xd0] sm:$0xff]
      %v810 = vld [vmem:[%s2 + $0xd8] sm:$0xff]
      %v811 = vld [vmem:[%s2 + $0xe0] sm:$0xff]
      %v812 = vld [vmem:[%s2 + $0xe8] sm:$0xff]
      %v813 = vld [vmem:[%s2 + $0xf0] sm:$0xff]
      %v814 = vld [vmem:[%s2 + $0xf8] sm:$0xff]
      %v815 = vpack.c.bf16 %v784, %v783
      %v816 = vpack.c.bf16 %v786, %v785
      %v817 = vpack.c.bf16 %v788, %v787
      %v818 = vpack.c.bf16 %v790, %v789
      %v819 = vpack.c.bf16 %v792, %v791
      %v820 = vpack.c.bf16 %v794, %v793
      %v821 = vpack.c.bf16 %v796, %v795
      %v822 = vpack.c.bf16 %v798, %v797
      %v823 = vpack.c.bf16 %v800, %v799
      %v824 = vpack.c.bf16 %v802, %v801
      %v825 = vpack.c.bf16 %v804, %v803
      %v826 = vpack.c.bf16 %v806, %v805
      %v827 = vpack.c.bf16 %v808, %v807
      %v828 = vpack.c.bf16 %v810, %v809
      %v829 = vpack.c.bf16 %v812, %v811
      %v830 = vpack.c.bf16 %v814, %v813
      %831 = vmatprep.subr.bf16.mxu0 0
      %832 = vmatpush1.bf16.msra.mxu0 %v822
      %833 = vmatprep.subr.bf16.mxu0 0
      %834 = vmatpush1.bf16.msra.mxu0 %v821
      %835 = vmatprep.subr.bf16.mxu0 0
      %836 = vmatpush1.bf16.msra.mxu0 %v820
      %837 = vmatprep.subr.bf16.mxu0 0
      %838 = vmatpush1.bf16.msra.mxu0 %v819
      %839 = vmatprep.subr.bf16.mxu0 0
      %840 = vmatpush1.bf16.msra.mxu0 %v818
      %841 = vmatprep.subr.bf16.mxu0 0
      %842 = vmatpush1.bf16.msra.mxu0 %v817
      %843 = vmatprep.subr.bf16.mxu0 0
      %844 = vmatpush1.bf16.msra.mxu0 %v816
      %845 = vmatprep.subr.bf16.mxu0 0
      %846 = vmatpush1.bf16.msra.mxu0 %v815
      %847 = vmatprep.subr.bf16.mxu0 0
      %848 = vmatpush2.bf16.msra.mxu0 %v830
      %849 = vmatprep.subr.bf16.mxu0 0
      %850 = vmatpush2.bf16.msra.mxu0 %v829
      %851 = vmatprep.subr.bf16.mxu0 0
      %852 = vmatpush2.bf16.msra.mxu0 %v828
      %853 = vmatprep.subr.bf16.mxu0 0
      %854 = vmatpush2.bf16.msra.mxu0 %v827
      %855 = vmatprep.subr.bf16.mxu0 0
      %856 = vmatpush2.bf16.msra.mxu0 %v826
      %857 = vmatprep.subr.bf16.mxu0 0
      %858 = vmatpush2.bf16.msra.mxu0 %v825
      %859 = vmatprep.subr.bf16.mxu0 0
      %860 = vmatpush2.bf16.msra.mxu0 %v824
      %861 = vmatprep.subr.bf16.mxu0 0
      %862 = vmatpush2.bf16.msra.mxu0 %v823
      %863 = vmatprep.mubr.bf16.mxu0 %v752
      %864 = vmatmul.mubr.bf16.gmra.mxu0 %v751
      %v865 = vpop.f32.mrf.mxu0
      %v866 = vadd.f32 0.0, %v865
      %v867 = vpop.f32.mrf.mxu0
      %v868 = vpop.f32.mrf.mxu0
      %v869 = vadd.f32 0.0, %v868
      %v870 = vpop.f32.mrf.mxu0
      %871 = vmatprep.mubr.bf16.mxu0 %v754
      %872 = vmatmul.mubr.bf16.gmra.mxu0 %v753
      %v873 = vpop.f32.mrf.mxu0
      %v874 = vadd.f32 0.0, %v873
      %v875 = vpop.f32.mrf.mxu0
      %v876 = vpop.f32.mrf.mxu0
      %v877 = vadd.f32 0.0, %v876
      %v878 = vpop.f32.mrf.mxu0
      %879 = vmatprep.mubr.bf16.mxu0 %v756
      %880 = vmatmul.mubr.bf16.gmra.mxu0 %v755
      %v881 = vpop.f32.mrf.mxu0
      %v882 = vadd.f32 0.0, %v881
      %v883 = vpop.f32.mrf.mxu0
      %v884 = vpop.f32.mrf.mxu0
      %v885 = vadd.f32 0.0, %v884
      %v886 = vpop.f32.mrf.mxu0
      %887 = vmatprep.mubr.bf16.mxu0 %v758
      %888 = vmatmul.mubr.bf16.gmra.mxu0 %v757
      %v889 = vpop.f32.mrf.mxu0
      %v890 = vadd.f32 0.0, %v889
      %v891 = vpop.f32.mrf.mxu0
      %v892 = vpop.f32.mrf.mxu0
      %v893 = vadd.f32 0.0, %v892
      %v894 = vpop.f32.mrf.mxu0
      %895 = vmatprep.mubr.bf16.mxu0 %v760
      %896 = vmatmul.mubr.bf16.gmra.mxu0 %v759
      %v897 = vpop.f32.mrf.mxu0
      %v898 = vadd.f32 0.0, %v897
      %v899 = vpop.f32.mrf.mxu0
      %v900 = vpop.f32.mrf.mxu0
      %v901 = vadd.f32 0.0, %v900
      %v902 = vpop.f32.mrf.mxu0
      %903 = vmatprep.mubr.bf16.mxu0 %v762
      %904 = vmatmul.mubr.bf16.gmra.mxu0 %v761
      %v905 = vpop.f32.mrf.mxu0
      %v906 = vadd.f32 0.0, %v905
      %v907 = vpop.f32.mrf.mxu0
      %v908 = vpop.f32.mrf.mxu0
      %v909 = vadd.f32 0.0, %v908
      %v910 = vpop.f32.mrf.mxu0
      %911 = vmatprep.mubr.bf16.mxu0 %v764
      %912 = vmatmul.mubr.bf16.gmra.mxu0 %v763
      %v913 = vpop.f32.mrf.mxu0
      %v914 = vadd.f32 0.0, %v913
      %v915 = vpop.f32.mrf.mxu0
      %v916 = vpop.f32.mrf.mxu0
      %v917 = vadd.f32 0.0, %v916
      %v918 = vpop.f32.mrf.mxu0
      %919 = vmatprep.mubr.bf16.mxu0 %v766
      %920 = vmatmul.mubr.bf16.gmra.mxu0 %v765
      %v921 = vpop.f32.mrf.mxu0
      %v922 = vadd.f32 0.0, %v921
      %v923 = vpop.f32.mrf.mxu0
      %v924 = vpop.f32.mrf.mxu0
      %v925 = vadd.f32 0.0, %v924
      %v926 = vpop.f32.mrf.mxu0
      %927 = vmatprep.mubr.bf16.mxu0 %v768
      %928 = vmatmul.mubr.bf16.gmra.mxu0 %v767
      %v929 = vpop.f32.mrf.mxu0
      %v930 = vadd.f32 0.0, %v929
      %v931 = vpop.f32.mrf.mxu0
      %v932 = vpop.f32.mrf.mxu0
      %v933 = vadd.f32 0.0, %v932
      %v934 = vpop.f32.mrf.mxu0
      %935 = vmatprep.mubr.bf16.mxu0 %v770
      %936 = vmatmul.mubr.bf16.gmra.mxu0 %v769
      %v937 = vpop.f32.mrf.mxu0
      %v938 = vadd.f32 0.0, %v937
      %v939 = vpop.f32.mrf.mxu0
      %v940 = vpop.f32.mrf.mxu0
      %v941 = vadd.f32 0.0, %v940
      %v942 = vpop.f32.mrf.mxu0
      %943 = vmatprep.mubr.bf16.mxu0 %v772
      %944 = vmatmul.mubr.bf16.gmra.mxu0 %v771
      %v945 = vpop.f32.mrf.mxu0
      %v946 = vadd.f32 0.0, %v945
      %v947 = vpop.f32.mrf.mxu0
      %v948 = vpop.f32.mrf.mxu0
      %v949 = vadd.f32 0.0, %v948
      %v950 = vpop.f32.mrf.mxu0
      %951 = vmatprep.mubr.bf16.mxu0 %v774
      %952 = vmatmul.mubr.bf16.gmra.mxu0 %v773
      %v953 = vpop.f32.mrf.mxu0
      %v954 = vadd.f32 0.0, %v953
      %v955 = vpop.f32.mrf.mxu0
      %v956 = vpop.f32.mrf.mxu0
      %v957 = vadd.f32 0.0, %v956
      %v958 = vpop.f32.mrf.mxu0
      %959 = vmatprep.mubr.bf16.mxu0 %v776
      %960 = vmatmul.mubr.bf16.gmra.mxu0 %v775
      %v961 = vpop.f32.mrf.mxu0
      %v962 = vadd.f32 0.0, %v961
      %v963 = vpop.f32.mrf.mxu0
      %v964 = vpop.f32.mrf.mxu0
      %v965 = vadd.f32 0.0, %v964
      %v966 = vpop.f32.mrf.mxu0
      %967 = vmatprep.mubr.bf16.mxu0 %v778
      %968 = vmatmul.mubr.bf16.gmra.mxu0 %v777
      %v969 = vpop.f32.mrf.mxu0
      %v970 = vadd.f32 0.0, %v969
      %v971 = vpop.f32.mrf.mxu0
      %v972 = vpop.f32.mrf.mxu0
      %v973 = vadd.f32 0.0, %v972
      %v974 = vpop.f32.mrf.mxu0
      %975 = vmatprep.mubr.bf16.mxu0 %v780
      %976 = vmatmul.mubr.bf16.gmra.mxu0 %v779
      %v977 = vpop.f32.mrf.mxu0
      %v978 = vadd.f32 0.0, %v977
      %v979 = vpop.f32.mrf.mxu0
      %v980 = vpop.f32.mrf.mxu0
      %v981 = vadd.f32 0.0, %v980
      %v982 = vpop.f32.mrf.mxu0
      %983 = vmatprep.mubr.bf16.mxu0 %v782
      %984 = vmatmul.mubr.bf16.gmra.mxu0 %v781
      %v985 = vpop.f32.mrf.mxu0
      %v986 = vadd.f32 0.0, %v985
      %v987 = vpop.f32.mrf.mxu0
      %v988 = vpop.f32.mrf.mxu0
      %v989 = vadd.f32 0.0, %v988
      %v990 = vpop.f32.mrf.mxu0
      %991 = vdwg.mxu0
      %s992 = smul.u32 %s23, 128
      %v993 = vlaneseq
      %v994 = vshrl.u32 %v993, 7
      %v995 = vadd.s32 %v994, 8
      %v996 = vadd.s32 %v994, 16
      %v997 = vadd.s32 %v994, 24
      %v998 = vadd.s32 %v994, 32
      %v999 = vadd.s32 %v994, 40
      %v1000 = vadd.s32 %v994, 48
      %v1001 = vadd.s32 %v994, 56
      %v1002 = vadd.s32 %v994, 64
      %v1003 = vadd.s32 %v994, 72
      %v1004 = vadd.s32 %v994, 80
      %v1005 = vadd.s32 %v994, 88
      %v1006 = vadd.s32 %v994, 96
      %v1007 = vadd.s32 %v994, 104
      %v1008 = vadd.s32 %v994, 112
      %v1009 = vadd.s32 %v994, 120
      %v1010 = vstv %s992
      %v1011 = vadd.s32 %v1010, %v994
      %v1012 = vadd.s32 %v1010, %v995
      %v1013 = vadd.s32 %v1010, %v996
      %v1014 = vadd.s32 %v1010, %v997
      %v1015 = vadd.s32 %v1010, %v998
      %v1016 = vadd.s32 %v1010, %v999
      %v1017 = vadd.s32 %v1010, %v1000
      %v1018 = vadd.s32 %v1010, %v1001
      %v1019 = vadd.s32 %v1010, %v1002
      %v1020 = vadd.s32 %v1010, %v1003
      %v1021 = vadd.s32 %v1010, %v1004
      %v1022 = vadd.s32 %v1010, %v1005
      %v1023 = vadd.s32 %v1010, %v1006
      %v1024 = vadd.s32 %v1010, %v1007
      %v1025 = vadd.s32 %v1010, %v1008
      %v1026 = vadd.s32 %v1010, %v1009
      %v1027 = vlaneseq
      %v1028 = vshrl.u32 %v1027, 7
      %v1029 = vsub.s32 0, %v1028
      %v1030 = vrot.slane %v459, %v1029
      %v1031 = vlaneseq
      %v1032 = vshrl.u32 %v1031, 7
      %v1033 = vsub.s32 1, %v1032
      %v1034 = vrot.slane %v459, %v1033
      %vm1035 = vcmp.eq.s32.totalorder %v1011, %v1030
      %vm1036 = vcmp.eq.s32.totalorder %v1011, %v1034
      %vm1037 = vcmp.eq.s32.totalorder %v1012, %v1030
      %vm1038 = vcmp.eq.s32.totalorder %v1012, %v1034
      %vm1039 = vcmp.eq.s32.totalorder %v1013, %v1030
      %vm1040 = vcmp.eq.s32.totalorder %v1013, %v1034
      %vm1041 = vcmp.eq.s32.totalorder %v1014, %v1030
      %vm1042 = vcmp.eq.s32.totalorder %v1014, %v1034
      %vm1043 = vcmp.eq.s32.totalorder %v1015, %v1030
      %vm1044 = vcmp.eq.s32.totalorder %v1015, %v1034
      %vm1045 = vcmp.eq.s32.totalorder %v1016, %v1030
      %vm1046 = vcmp.eq.s32.totalorder %v1016, %v1034
      %vm1047 = vcmp.eq.s32.totalorder %v1017, %v1030
      %vm1048 = vcmp.eq.s32.totalorder %v1017, %v1034
      %vm1049 = vcmp.eq.s32.totalorder %v1018, %v1030
      %vm1050 = vcmp.eq.s32.totalorder %v1018, %v1034
      %vm1051 = vcmp.eq.s32.totalorder %v1019, %v1030
      %vm1052 = vcmp.eq.s32.totalorder %v1019, %v1034
      %vm1053 = vcmp.eq.s32.totalorder %v1020, %v1030
      %vm1054 = vcmp.eq.s32.totalorder %v1020, %v1034
      %vm1055 = vcmp.eq.s32.totalorder %v1021, %v1030
      %vm1056 = vcmp.eq.s32.totalorder %v1021, %v1034
      %vm1057 = vcmp.eq.s32.totalorder %v1022, %v1030
      %vm1058 = vcmp.eq.s32.totalorder %v1022, %v1034
      %vm1059 = vcmp.eq.s32.totalorder %v1023, %v1030
      %vm1060 = vcmp.eq.s32.totalorder %v1023, %v1034
      %vm1061 = vcmp.eq.s32.totalorder %v1024, %v1030
      %vm1062 = vcmp.eq.s32.totalorder %v1024, %v1034
      %vm1063 = vcmp.eq.s32.totalorder %v1025, %v1030
      %vm1064 = vcmp.eq.s32.totalorder %v1025, %v1034
      %vm1065 = vcmp.eq.s32.totalorder %v1026, %v1030
      %vm1066 = vcmp.eq.s32.totalorder %v1026, %v1034
      %v1067 = vsel %vm1035, 1, 0
      %v1068 = vsel %vm1036, 1, 0
      %v1069 = vsel %vm1037, 1, 0
      %v1070 = vsel %vm1038, 1, 0
      %v1071 = vsel %vm1039, 1, 0
      %v1072 = vsel %vm1040, 1, 0
      %v1073 = vsel %vm1041, 1, 0
      %v1074 = vsel %vm1042, 1, 0
      %v1075 = vsel %vm1043, 1, 0
      %v1076 = vsel %vm1044, 1, 0
      %v1077 = vsel %vm1045, 1, 0
      %v1078 = vsel %vm1046, 1, 0
      %v1079 = vsel %vm1047, 1, 0
      %v1080 = vsel %vm1048, 1, 0
      %v1081 = vsel %vm1049, 1, 0
      %v1082 = vsel %vm1050, 1, 0
      %v1083 = vsel %vm1051, 1, 0
      %v1084 = vsel %vm1052, 1, 0
      %v1085 = vsel %vm1053, 1, 0
      %v1086 = vsel %vm1054, 1, 0
      %v1087 = vsel %vm1055, 1, 0
      %v1088 = vsel %vm1056, 1, 0
      %v1089 = vsel %vm1057, 1, 0
      %v1090 = vsel %vm1058, 1, 0
      %v1091 = vsel %vm1059, 1, 0
      %v1092 = vsel %vm1060, 1, 0
      %v1093 = vsel %vm1061, 1, 0
      %v1094 = vsel %vm1062, 1, 0
      %v1095 = vsel %vm1063, 1, 0
      %v1096 = vsel %vm1064, 1, 0
      %v1097 = vsel %vm1065, 1, 0
      %v1098 = vsel %vm1066, 1, 0
      %v1099 = vcvt.s32.f32 %v1067
      %v1100 = vcvt.s32.f32 %v1068
      %v1101 = vcvt.s32.f32 %v1069
      %v1102 = vcvt.s32.f32 %v1070
      %v1103 = vcvt.s32.f32 %v1071
      %v1104 = vcvt.s32.f32 %v1072
      %v1105 = vcvt.s32.f32 %v1073
      %v1106 = vcvt.s32.f32 %v1074
      %v1107 = vcvt.s32.f32 %v1075
      %v1108 = vcvt.s32.f32 %v1076
      %v1109 = vcvt.s32.f32 %v1077
      %v1110 = vcvt.s32.f32 %v1078
      %v1111 = vcvt.s32.f32 %v1079
      %v1112 = vcvt.s32.f32 %v1080
      %v1113 = vcvt.s32.f32 %v1081
      %v1114 = vcvt.s32.f32 %v1082
      %v1115 = vcvt.s32.f32 %v1083
      %v1116 = vcvt.s32.f32 %v1084
      %v1117 = vcvt.s32.f32 %v1085
      %v1118 = vcvt.s32.f32 %v1086
      %v1119 = vcvt.s32.f32 %v1087
      %v1120 = vcvt.s32.f32 %v1088
      %v1121 = vcvt.s32.f32 %v1089
      %v1122 = vcvt.s32.f32 %v1090
      %v1123 = vcvt.s32.f32 %v1091
      %v1124 = vcvt.s32.f32 %v1092
      %v1125 = vcvt.s32.f32 %v1093
      %v1126 = vcvt.s32.f32 %v1094
      %v1127 = vcvt.s32.f32 %v1095
      %v1128 = vcvt.s32.f32 %v1096
      %v1129 = vcvt.s32.f32 %v1097
      %v1130 = vcvt.s32.f32 %v1098
      %v1131 = vpack.c.bf16 %v1101, %v1099
      %v1132 = vpack.c.bf16 %v1102, %v1100
      %v1133 = vpack.c.bf16 %v1105, %v1103
      %v1134 = vpack.c.bf16 %v1106, %v1104
      %v1135 = vpack.c.bf16 %v1109, %v1107
      %v1136 = vpack.c.bf16 %v1110, %v1108
      %v1137 = vpack.c.bf16 %v1113, %v1111
      %v1138 = vpack.c.bf16 %v1114, %v1112
      %v1139 = vpack.c.bf16 %v1117, %v1115
      %v1140 = vpack.c.bf16 %v1118, %v1116
      %v1141 = vpack.c.bf16 %v1121, %v1119
      %v1142 = vpack.c.bf16 %v1122, %v1120
      %v1143 = vpack.c.bf16 %v1125, %v1123
      %v1144 = vpack.c.bf16 %v1126, %v1124
      %v1145 = vpack.c.bf16 %v1129, %v1127
      %v1146 = vpack.c.bf16 %v1130, %v1128
      %v1147 = vld [vmem:[#allocation2] sm:$0xff]
      %v1148 = vld [vmem:[#allocation2 + $0x8] sm:$0xff]
      %v1149 = vld [vmem:[#allocation2 + $0x10] sm:$0xff]
      %v1150 = vld [vmem:[#allocation2 + $0x18] sm:$0xff]
      %v1151 = vld [vmem:[#allocation2 + $0x20] sm:$0xff]
      %v1152 = vld [vmem:[#allocation2 + $0x28] sm:$0xff]
      %v1153 = vld [vmem:[#allocation2 + $0x30] sm:$0xff]
      %v1154 = vld [vmem:[#allocation2 + $0x38] sm:$0xff]
      %v1155 = vld [vmem:[#allocation2 + $0x40] sm:$0xff]
      %v1156 = vld [vmem:[#allocation2 + $0x48] sm:$0xff]
      %v1157 = vld [vmem:[#allocation2 + $0x50] sm:$0xff]
      %v1158 = vld [vmem:[#allocation2 + $0x58] sm:$0xff]
      %v1159 = vld [vmem:[#allocation2 + $0x60] sm:$0xff]
      %v1160 = vld [vmem:[#allocation2 + $0x68] sm:$0xff]
      %v1161 = vld [vmem:[#allocation2 + $0x70] sm:$0xff]
      %v1162 = vld [vmem:[#allocation2 + $0x78] sm:$0xff]
      %v1163 = vpack.c.bf16 %v869, %v866
      %v1164 = vpack.c.bf16 %v877, %v874
      %v1165 = vpack.c.bf16 %v885, %v882
      %v1166 = vpack.c.bf16 %v893, %v890
      %v1167 = vpack.c.bf16 %v901, %v898
      %v1168 = vpack.c.bf16 %v909, %v906
      %v1169 = vpack.c.bf16 %v917, %v914
      %v1170 = vpack.c.bf16 %v925, %v922
      %v1171 = vpack.c.bf16 %v933, %v930
      %v1172 = vpack.c.bf16 %v941, %v938
      %v1173 = vpack.c.bf16 %v949, %v946
      %v1174 = vpack.c.bf16 %v957, %v954
      %v1175 = vpack.c.bf16 %v965, %v962
      %v1176 = vpack.c.bf16 %v973, %v970
      %v1177 = vpack.c.bf16 %v981, %v978
      %v1178 = vpack.c.bf16 %v989, %v986
      %1179 = vmatprep.subr.bf16.mxu0 0
      %1180 = vmatpush1.bf16.msra.mxu0 %v1170
      %1181 = vmatprep.subr.bf16.mxu0 0
      %1182 = vmatpush1.bf16.msra.mxu0 %v1169
      %1183 = vmatprep.subr.bf16.mxu0 0
      %1184 = vmatpush1.bf16.msra.mxu0 %v1168
      %1185 = vmatprep.subr.bf16.mxu0 0
      %1186 = vmatpush1.bf16.msra.mxu0 %v1167
      %1187 = vmatprep.subr.bf16.mxu0 0
      %1188 = vmatpush1.bf16.msra.mxu0 %v1166
      %1189 = vmatprep.subr.bf16.mxu0 0
      %1190 = vmatpush1.bf16.msra.mxu0 %v1165
      %1191 = vmatprep.subr.bf16.mxu0 0
      %1192 = vmatpush1.bf16.msra.mxu0 %v1164
      %1193 = vmatprep.subr.bf16.mxu0 0
      %1194 = vmatpush1.bf16.msra.mxu0 %v1163
      %1195 = vmatprep.subr.bf16.mxu0 0
      %1196 = vmatpush2.bf16.msra.mxu0 %v1178
      %1197 = vmatprep.subr.bf16.mxu0 0
      %1198 = vmatpush2.bf16.msra.mxu0 %v1177
      %1199 = vmatprep.subr.bf16.mxu0 0
      %1200 = vmatpush2.bf16.msra.mxu0 %v1176
      %1201 = vmatprep.subr.bf16.mxu0 0
      %1202 = vmatpush2.bf16.msra.mxu0 %v1175
      %1203 = vmatprep.subr.bf16.mxu0 0
      %1204 = vmatpush2.bf16.msra.mxu0 %v1174
      %1205 = vmatprep.subr.bf16.mxu0 0
      %1206 = vmatpush2.bf16.msra.mxu0 %v1173
      %1207 = vmatprep.subr.bf16.mxu0 0
      %1208 = vmatpush2.bf16.msra.mxu0 %v1172
      %1209 = vmatprep.subr.bf16.mxu0 0
      %1210 = vmatpush2.bf16.msra.mxu0 %v1171
      %1211 = vmatprep.mubr.bf16.mxu0 %v1132
      %1212 = vmatmul.mubr.bf16.gmra.mxu0 %v1131
      %v1213 = vpop.f32.mrf.mxu0
      %v1214 = vadd.f32 0.0, %v1213
      %v1215 = vpop.f32.mrf.mxu0
      %v1216 = vpop.f32.mrf.mxu0
      %v1217 = vadd.f32 0.0, %v1216
      %v1218 = vpop.f32.mrf.mxu0
      %1219 = vmatprep.mubr.bf16.mxu0 %v1134
      %1220 = vmatmul.mubr.bf16.gmra.mxu0 %v1133
      %v1221 = vpop.f32.mrf.mxu0
      %v1222 = vadd.f32 0.0, %v1221
      %v1223 = vpop.f32.mrf.mxu0
      %v1224 = vpop.f32.mrf.mxu0
      %v1225 = vadd.f32 0.0, %v1224
      %v1226 = vpop.f32.mrf.mxu0
      %1227 = vmatprep.mubr.bf16.mxu0 %v1136
      %1228 = vmatmul.mubr.bf16.gmra.mxu0 %v1135
      %v1229 = vpop.f32.mrf.mxu0
      %v1230 = vadd.f32 0.0, %v1229
      %v1231 = vpop.f32.mrf.mxu0
      %v1232 = vpop.f32.mrf.mxu0
      %v1233 = vadd.f32 0.0, %v1232
      %v1234 = vpop.f32.mrf.mxu0
      %1235 = vmatprep.mubr.bf16.mxu0 %v1138
      %1236 = vmatmul.mubr.bf16.gmra.mxu0 %v1137
      %v1237 = vpop.f32.mrf.mxu0
      %v1238 = vadd.f32 0.0, %v1237
      %v1239 = vpop.f32.mrf.mxu0
      %v1240 = vpop.f32.mrf.mxu0
      %v1241 = vadd.f32 0.0, %v1240
      %v1242 = vpop.f32.mrf.mxu0
      %1243 = vmatprep.mubr.bf16.mxu0 %v1140
      %1244 = vmatmul.mubr.bf16.gmra.mxu0 %v1139
      %v1245 = vpop.f32.mrf.mxu0
      %v1246 = vadd.f32 0.0, %v1245
      %v1247 = vpop.f32.mrf.mxu0
      %v1248 = vpop.f32.mrf.mxu0
      %v1249 = vadd.f32 0.0, %v1248
      %v1250 = vpop.f32.mrf.mxu0
      %1251 = vmatprep.mubr.bf16.mxu0 %v1142
      %1252 = vmatmul.mubr.bf16.gmra.mxu0 %v1141
      %v1253 = vpop.f32.mrf.mxu0
      %v1254 = vadd.f32 0.0, %v1253
      %v1255 = vpop.f32.mrf.mxu0
      %v1256 = vpop.f32.mrf.mxu0
      %v1257 = vadd.f32 0.0, %v1256
      %v1258 = vpop.f32.mrf.mxu0
      %1259 = vmatprep.mubr.bf16.mxu0 %v1144
      %1260 = vmatmul.mubr.bf16.gmra.mxu0 %v1143
      %v1261 = vpop.f32.mrf.mxu0
      %v1262 = vadd.f32 0.0, %v1261
      %v1263 = vpop.f32.mrf.mxu0
      %v1264 = vpop.f32.mrf.mxu0
      %v1265 = vadd.f32 0.0, %v1264
      %v1266 = vpop.f32.mrf.mxu0
      %1267 = vmatprep.mubr.bf16.mxu0 %v1146
      %1268 = vmatmul.mubr.bf16.gmra.mxu0 %v1145
      %v1269 = vpop.f32.mrf.mxu0
      %v1270 = vadd.f32 0.0, %v1269
      %v1271 = vpop.f32.mrf.mxu0
      %v1272 = vpop.f32.mrf.mxu0
      %v1273 = vadd.f32 0.0, %v1272
      %v1274 = vpop.f32.mrf.mxu0
      %1275 = vdwg.mxu0
      %v1276 = vadd.f32 %v1147, %v1214
      %v1277 = vadd.f32 %v1148, %v1217
      %v1278 = vadd.f32 %v1149, %v1222
      %v1279 = vadd.f32 %v1150, %v1225
      %v1280 = vadd.f32 %v1151, %v1230
      %v1281 = vadd.f32 %v1152, %v1233
      %v1282 = vadd.f32 %v1153, %v1238
      %v1283 = vadd.f32 %v1154, %v1241
      %v1284 = vadd.f32 %v1155, %v1246
      %v1285 = vadd.f32 %v1156, %v1249
      %v1286 = vadd.f32 %v1157, %v1254
      %v1287 = vadd.f32 %v1158, %v1257
      %v1288 = vadd.f32 %v1159, %v1262
      %v1289 = vadd.f32 %v1160, %v1265
      %v1290 = vadd.f32 %v1161, %v1270
      %v1291 = vadd.f32 %v1162, %v1273
      %1292 = vst [vmem:[#allocation2] sm:$0xff] %v1276
      %1293 = vst [vmem:[#allocation2 + $0x8] sm:$0xff] %v1277
      %1294 = vst [vmem:[#allocation2 + $0x10] sm:$0xff] %v1278
      %1295 = vst [vmem:[#allocation2 + $0x18] sm:$0xff] %v1279
      %1296 = vst [vmem:[#allocation2 + $0x20] sm:$0xff] %v1280
      %1297 = vst [vmem:[#allocation2 + $0x28] sm:$0xff] %v1281
      %1298 = vst [vmem:[#allocation2 + $0x30] sm:$0xff] %v1282
      %1299 = vst [vmem:[#allocation2 + $0x38] sm:$0xff] %v1283
      %1300 = vst [vmem:[#allocation2 + $0x40] sm:$0xff] %v1284
      %1301 = vst [vmem:[#allocation2 + $0x48] sm:$0xff] %v1285
      %1302 = vst [vmem:[#allocation2 + $0x50] sm:$0xff] %v1286
      %1303 = vst [vmem:[#allocation2 + $0x58] sm:$0xff] %v1287
      %1304 = vst [vmem:[#allocation2 + $0x60] sm:$0xff] %v1288
      %1305 = vst [vmem:[#allocation2 + $0x68] sm:$0xff] %v1289
      %1306 = vst [vmem:[#allocation2 + $0x70] sm:$0xff] %v1290
      %1307 = vst [vmem:[#allocation2 + $0x78] sm:$0xff] %v1291
      %p1308 = scmp.eq.s32.totalorder %s24, 3
      // Predicated region
      $region57: #{hetero_gcn_forward.1} parent=51 // pred_check
        %p1309 = pneg %p1308
      $region58: #{hetero_gcn_forward.1} parent=51 // pred_check_branch
        %1311 = sbr.rel (%p1309) target = $region60
      $region59: #{hetero_gcn_forward.1} parent=51 // pred_region
        %v1312 = vld [vmem:[#allocation2] sm:$0xff]
        %v1313 = vld [vmem:[#allocation2 + $0x8] sm:$0xff]
        %v1314 = vld [vmem:[#allocation2 + $0x10] sm:$0xff]
        %v1315 = vld [vmem:[#allocation2 + $0x18] sm:$0xff]
        %v1316 = vld [vmem:[#allocation2 + $0x20] sm:$0xff]
        %v1317 = vld [vmem:[#allocation2 + $0x28] sm:$0xff]
        %v1318 = vld [vmem:[#allocation2 + $0x30] sm:$0xff]
        %v1319 = vld [vmem:[#allocation2 + $0x38] sm:$0xff]
        %v1320 = vld [vmem:[#allocation2 + $0x40] sm:$0xff]
        %v1321 = vld [vmem:[#allocation2 + $0x48] sm:$0xff]
        %v1322 = vld [vmem:[#allocation2 + $0x50] sm:$0xff]
        %v1323 = vld [vmem:[#allocation2 + $0x58] sm:$0xff]
        %v1324 = vld [vmem:[#allocation2 + $0x60] sm:$0xff]
        %v1325 = vld [vmem:[#allocation2 + $0x68] sm:$0xff]
        %v1326 = vld [vmem:[#allocation2 + $0x70] sm:$0xff]
        %v1327 = vld [vmem:[#allocation2 + $0x78] sm:$0xff]
        %v1328 = vmax.f32 %v1312, 1.0
        %v1329 = vmax.f32 %v1313, 1.0
        %v1330 = vmax.f32 %v1314, 1.0
        %v1331 = vmax.f32 %v1315, 1.0
        %v1332 = vmax.f32 %v1316, 1.0
        %v1333 = vmax.f32 %v1317, 1.0
        %v1334 = vmax.f32 %v1318, 1.0
        %v1335 = vmax.f32 %v1319, 1.0
        %v1336 = vmax.f32 %v1320, 1.0
        %v1337 = vmax.f32 %v1321, 1.0
        %v1338 = vmax.f32 %v1322, 1.0
        %v1339 = vmax.f32 %v1323, 1.0
        %v1340 = vmax.f32 %v1324, 1.0
        %v1341 = vmax.f32 %v1325, 1.0
        %v1342 = vmax.f32 %v1326, 1.0
        %v1343 = vmax.f32 %v1327, 1.0
        %v1344 = vrcp.pop %v1328
        %v1345 = vrcp.pop %v1329
        %v1346 = vrcp.pop %v1330
        %v1347 = vrcp.pop %v1331
        %v1348 = vrcp.pop %v1332
        %v1349 = vrcp.pop %v1333
        %v1350 = vrcp.pop %v1334
        %v1351 = vrcp.pop %v1335
        %v1352 = vrcp.pop %v1336
        %v1353 = vrcp.pop %v1337
        %v1354 = vrcp.pop %v1338
        %v1355 = vrcp.pop %v1339
        %v1356 = vrcp.pop %v1340
        %v1357 = vrcp.pop %v1341
        %v1358 = vrcp.pop %v1342
        %v1359 = vrcp.pop %v1343
        %1361 = vset.pattern.permute.xlu0 127
        %1362 = vperm.xlu0 %1361, %v1344
        %v1363 = vpop.permute.xlu0 %1362
        %1366 = vset.pattern.permute.xlu0 127
        %1367 = vperm.xlu0 %1366, %v1345
        %v1368 = vpop.permute.xlu0 %1367
        %1371 = vset.pattern.permute.xlu0 127
        %1372 = vperm.xlu0 %1371, %v1346
        %v1373 = vpop.permute.xlu0 %1372
        %1376 = vset.pattern.permute.xlu0 127
        %1377 = vperm.xlu0 %1376, %v1347
        %v1378 = vpop.permute.xlu0 %1377
        %1381 = vset.pattern.permute.xlu0 127
        %1382 = vperm.xlu0 %1381, %v1348
        %v1383 = vpop.permute.xlu0 %1382
        %1386 = vset.pattern.permute.xlu0 127
        %1387 = vperm.xlu0 %1386, %v1349
        %v1388 = vpop.permute.xlu0 %1387
        %1391 = vset.pattern.permute.xlu0 127
        %1392 = vperm.xlu0 %1391, %v1350
        %v1393 = vpop.permute.xlu0 %1392
        %1396 = vset.pattern.permute.xlu0 127
        %1397 = vperm.xlu0 %1396, %v1351
        %v1398 = vpop.permute.xlu0 %1397
        %1401 = vset.pattern.permute.xlu0 127
        %1402 = vperm.xlu0 %1401, %v1352
        %v1403 = vpop.permute.xlu0 %1402
        %1406 = vset.pattern.permute.xlu0 127
        %1407 = vperm.xlu0 %1406, %v1353
        %v1408 = vpop.permute.xlu0 %1407
        %1411 = vset.pattern.permute.xlu0 127
        %1412 = vperm.xlu0 %1411, %v1354
        %v1413 = vpop.permute.xlu0 %1412
        %1416 = vset.pattern.permute.xlu0 127
        %1417 = vperm.xlu0 %1416, %v1355
        %v1418 = vpop.permute.xlu0 %1417
        %1421 = vset.pattern.permute.xlu0 127
        %1422 = vperm.xlu0 %1421, %v1356
        %v1423 = vpop.permute.xlu0 %1422
        %1426 = vset.pattern.permute.xlu0 127
        %1427 = vperm.xlu0 %1426, %v1357
        %v1428 = vpop.permute.xlu0 %1427
        %1431 = vset.pattern.permute.xlu0 127
        %1432 = vperm.xlu0 %1431, %v1358
        %v1433 = vpop.permute.xlu0 %1432
        %1436 = vset.pattern.permute.xlu0 127
        %1437 = vperm.xlu0 %1436, %v1359
        %v1438 = vpop.permute.xlu0 %1437
        %v1440 = vmul.f32 %v1312, %v1363
        %v1441 = vmul.f32 %v1313, %v1368
        %v1442 = vmul.f32 %v1314, %v1373
        %v1443 = vmul.f32 %v1315, %v1378
        %v1444 = vmul.f32 %v1316, %v1383
        %v1445 = vmul.f32 %v1317, %v1388
        %v1446 = vmul.f32 %v1318, %v1393
        %v1447 = vmul.f32 %v1319, %v1398
        %v1448 = vmul.f32 %v1320, %v1403
        %v1449 = vmul.f32 %v1321, %v1408
        %v1450 = vmul.f32 %v1322, %v1413
        %v1451 = vmul.f32 %v1323, %v1418
        %v1452 = vmul.f32 %v1324, %v1423
        %v1453 = vmul.f32 %v1325, %v1428
        %v1454 = vmul.f32 %v1326, %v1433
        %v1455 = vmul.f32 %v1327, %v1438
        %s1456 = scalar_lea.vmem %s2, %s992
        %v1457 = vld [vmem:[%s1456] sm:$0xff]
        %v1458 = vld [vmem:[%s1456 + $0x8] sm:$0xff]
        %v1459 = vld [vmem:[%s1456 + $0x10] sm:$0xff]
        %v1460 = vld [vmem:[%s1456 + $0x18] sm:$0xff]
        %v1461 = vld [vmem:[%s1456 + $0x20] sm:$0xff]
        %v1462 = vld [vmem:[%s1456 + $0x28] sm:$0xff]
        %v1463 = vld [vmem:[%s1456 + $0x30] sm:$0xff]
        %v1464 = vld [vmem:[%s1456 + $0x38] sm:$0xff]
        %v1465 = vld [vmem:[%s1456 + $0x40] sm:$0xff]
        %v1466 = vld [vmem:[%s1456 + $0x48] sm:$0xff]
        %v1467 = vld [vmem:[%s1456 + $0x50] sm:$0xff]
        %v1468 = vld [vmem:[%s1456 + $0x58] sm:$0xff]
        %v1469 = vld [vmem:[%s1456 + $0x60] sm:$0xff]
        %v1470 = vld [vmem:[%s1456 + $0x68] sm:$0xff]
        %v1471 = vld [vmem:[%s1456 + $0x70] sm:$0xff]
        %v1472 = vld [vmem:[%s1456 + $0x78] sm:$0xff]
        %v1473 = vld [vmem:[%s3] sm:$0xff]
        %v1474 = vld [vmem:[%s3 + $0x8] sm:$0xff]
        %v1475 = vld [vmem:[%s3 + $0x10] sm:$0xff]
        %v1476 = vld [vmem:[%s3 + $0x18] sm:$0xff]
        %v1477 = vld [vmem:[%s3 + $0x20] sm:$0xff]
        %v1478 = vld [vmem:[%s3 + $0x28] sm:$0xff]
        %v1479 = vld [vmem:[%s3 + $0x30] sm:$0xff]
        %v1480 = vld [vmem:[%s3 + $0x38] sm:$0xff]
        %v1481 = vld [vmem:[%s3 + $0x40] sm:$0xff]
        %v1482 = vld [vmem:[%s3 + $0x48] sm:$0xff]
        %v1483 = vld [vmem:[%s3 + $0x50] sm:$0xff]
        %v1484 = vld [vmem:[%s3 + $0x58] sm:$0xff]
        %v1485 = vld [vmem:[%s3 + $0x60] sm:$0xff]
        %v1486 = vld [vmem:[%s3 + $0x68] sm:$0xff]
        %v1487 = vld [vmem:[%s3 + $0x70] sm:$0xff]
        %v1488 = vld [vmem:[%s3 + $0x78] sm:$0xff]
        %v1489 = vld [vmem:[%s4] sm:$0x1]
        %v1491 = vlaneseq
        %v1492 = vshrl.u32 %v1491, 7
        %v1493 = vsub.s32 0, %v1492
        %v1494 = vrot.slane %v1489, %v1493
        %1496 = vmatprep.subr.mxu0 0.0
        %1497 = vmatpush1.msra.mxu0 %v1488
        %1498 = vmatprep.subr.mxu0 0.0
        %1499 = vmatpush1.msra.mxu0 %v1487
        %1500 = vmatprep.subr.mxu0 0.0
        %1501 = vmatpush1.msra.mxu0 %v1486
        %1502 = vmatprep.subr.mxu0 0.0
        %1503 = vmatpush1.msra.mxu0 %v1485
        %1504 = vmatprep.subr.mxu0 0.0
        %1505 = vmatpush1.msra.mxu0 %v1484
        %1506 = vmatprep.subr.mxu0 0.0
        %1507 = vmatpush1.msra.mxu0 %v1483
        %1508 = vmatprep.subr.mxu0 0.0
        %1509 = vmatpush1.msra.mxu0 %v1482
        %1510 = vmatprep.subr.mxu0 0.0
        %1511 = vmatpush1.msra.mxu0 %v1481
        %1512 = vmatprep.subr.mxu0 0.0
        %1513 = vmatpush1.msra.mxu0 %v1480
        %1514 = vmatprep.subr.mxu0 0.0
        %1515 = vmatpush1.msra.mxu0 %v1479
        %1516 = vmatprep.subr.mxu0 0.0
        %1517 = vmatpush1.msra.mxu0 %v1478
        %1518 = vmatprep.subr.mxu0 0.0
        %1519 = vmatpush1.msra.mxu0 %v1477
        %1520 = vmatprep.subr.mxu0 0.0
        %1521 = vmatpush1.msra.mxu0 %v1476
        %1522 = vmatprep.subr.mxu0 0.0
        %1523 = vmatpush1.msra.mxu0 %v1475
        %1524 = vmatprep.subr.mxu0 0.0
        %1525 = vmatpush1.msra.mxu0 %v1474
        %1526 = vmatprep.subr.mxu0 0.0
        %1527 = vmatpush1.msra.mxu0 %v1473
        %1528 = vmatprep.subr.mxu0 0.0
        %1529 = vmatpush2.msra.mxu0 0.0
        %1530 = vmatprep.subr.mxu0 0.0
        %1531 = vmatpush2.msra.mxu0 0.0
        %1532 = vmatprep.subr.mxu0 0.0
        %1533 = vmatpush2.msra.mxu0 0.0
        %1534 = vmatprep.subr.mxu0 0.0
        %1535 = vmatpush2.msra.mxu0 0.0
        %1536 = vmatprep.subr.mxu0 0.0
        %1537 = vmatpush2.msra.mxu0 0.0
        %1538 = vmatprep.subr.mxu0 0.0
        %1539 = vmatpush2.msra.mxu0 0.0
        %1540 = vmatprep.subr.mxu0 0.0
        %1541 = vmatpush2.msra.mxu0 0.0
        %1542 = vmatprep.subr.mxu0 0.0
        %1543 = vmatpush2.msra.mxu0 0.0
        %1544 = vmatprep.subr.mxu0 0.0
        %1545 = vmatpush2.msra.mxu0 0.0
        %1546 = vmatprep.subr.mxu0 0.0
        %1547 = vmatpush2.msra.mxu0 0.0
        %1548 = vmatprep.subr.mxu0 0.0
        %1549 = vmatpush2.msra.mxu0 0.0
        %1550 = vmatprep.subr.mxu0 0.0
        %1551 = vmatpush2.msra.mxu0 0.0
        %1552 = vmatprep.subr.mxu0 0.0
        %1553 = vmatpush2.msra.mxu0 0.0
        %1554 = vmatprep.subr.mxu0 0.0
        %1555 = vmatpush2.msra.mxu0 0.0
        %1556 = vmatprep.subr.mxu0 0.0
        %1557 = vmatpush2.msra.mxu0 0.0
        %1558 = vmatprep.subr.mxu0 0.0
        %1559 = vmatpush2.msra.mxu0 0.0
        %1560 = vmatprep.mubr.f32.mxu0 0.0
        %1561 = vmatmul.mubr.f32.gmra.mxu0 %v1440
        %v1562 = vpop.f32.mrf.mxu0
        %v1563 = vadd.f32 %v1494, %v1562
        %v1564 = vpop.f32.mrf.mxu0
        %1565 = vmatprep.mubr.f32.mxu0 0.0
        %1566 = vmatmul.mubr.f32.gmra.mxu0 %v1441
        %v1567 = vpop.f32.mrf.mxu0
        %v1568 = vadd.f32 %v1494, %v1567
        %v1569 = vpop.f32.mrf.mxu0
        %1570 = vmatprep.mubr.f32.mxu0 0.0
        %1571 = vmatmul.mubr.f32.gmra.mxu0 %v1442
        %v1572 = vpop.f32.mrf.mxu0
        %v1573 = vadd.f32 %v1494, %v1572
        %v1574 = vpop.f32.mrf.mxu0
        %1575 = vmatprep.mubr.f32.mxu0 0.0
        %1576 = vmatmul.mubr.f32.gmra.mxu0 %v1443
        %v1577 = vpop.f32.mrf.mxu0
        %v1578 = vadd.f32 %v1494, %v1577
        %v1579 = vpop.f32.mrf.mxu0
        %1580 = vmatprep.mubr.f32.mxu0 0.0
        %1581 = vmatmul.mubr.f32.gmra.mxu0 %v1444
        %v1582 = vpop.f32.mrf.mxu0
        %v1583 = vadd.f32 %v1494, %v1582
        %v1584 = vpop.f32.mrf.mxu0
        %1585 = vmatprep.mubr.f32.mxu0 0.0
        %1586 = vmatmul.mubr.f32.gmra.mxu0 %v1445
        %v1587 = vpop.f32.mrf.mxu0
        %v1588 = vadd.f32 %v1494, %v1587
        %v1589 = vpop.f32.mrf.mxu0
        %1590 = vmatprep.mubr.f32.mxu0 0.0
        %1591 = vmatmul.mubr.f32.gmra.mxu0 %v1446
        %v1592 = vpop.f32.mrf.mxu0
        %v1593 = vadd.f32 %v1494, %v1592
        %v1594 = vpop.f32.mrf.mxu0
        %1595 = vmatprep.mubr.f32.mxu0 0.0
        %1596 = vmatmul.mubr.f32.gmra.mxu0 %v1447
        %v1597 = vpop.f32.mrf.mxu0
        %v1598 = vadd.f32 %v1494, %v1597
        %v1599 = vpop.f32.mrf.mxu0
        %1600 = vmatprep.mubr.f32.mxu0 0.0
        %1601 = vmatmul.mubr.f32.gmra.mxu0 %v1448
        %v1602 = vpop.f32.mrf.mxu0
        %v1603 = vadd.f32 %v1494, %v1602
        %v1604 = vpop.f32.mrf.mxu0
        %1605 = vmatprep.mubr.f32.mxu0 0.0
        %1606 = vmatmul.mubr.f32.gmra.mxu0 %v1449
        %v1607 = vpop.f32.mrf.mxu0
        %v1608 = vadd.f32 %v1494, %v1607
        %v1609 = vpop.f32.mrf.mxu0
        %1610 = vmatprep.mubr.f32.mxu0 0.0
        %1611 = vmatmul.mubr.f32.gmra.mxu0 %v1450
        %v1612 = vpop.f32.mrf.mxu0
        %v1613 = vadd.f32 %v1494, %v1612
        %v1614 = vpop.f32.mrf.mxu0
        %1615 = vmatprep.mubr.f32.mxu0 0.0
        %1616 = vmatmul.mubr.f32.gmra.mxu0 %v1451
        %v1617 = vpop.f32.mrf.mxu0
        %v1618 = vadd.f32 %v1494, %v1617
        %v1619 = vpop.f32.mrf.mxu0
        %1620 = vmatprep.mubr.f32.mxu0 0.0
        %1621 = vmatmul.mubr.f32.gmra.mxu0 %v1452
        %v1622 = vpop.f32.mrf.mxu0
        %v1623 = vadd.f32 %v1494, %v1622
        %v1624 = vpop.f32.mrf.mxu0
        %1625 = vmatprep.mubr.f32.mxu0 0.0
        %1626 = vmatmul.mubr.f32.gmra.mxu0 %v1453
        %v1627 = vpop.f32.mrf.mxu0
        %v1628 = vadd.f32 %v1494, %v1627
        %v1629 = vpop.f32.mrf.mxu0
        %1630 = vmatprep.mubr.f32.mxu0 0.0
        %1631 = vmatmul.mubr.f32.gmra.mxu0 %v1454
        %v1632 = vpop.f32.mrf.mxu0
        %v1633 = vadd.f32 %v1494, %v1632
        %v1634 = vpop.f32.mrf.mxu0
        %1635 = vmatprep.mubr.f32.mxu0 0.0
        %1636 = vmatmul.mubr.f32.gmra.mxu0 %v1455
        %v1637 = vpop.f32.mrf.mxu0
        %v1638 = vadd.f32 %v1494, %v1637
        %v1639 = vpop.f32.mrf.mxu0
        %1640 = vdwg.mxu0
        %v1641 = vld [vmem:[%s5] sm:$0xff]
        %v1642 = vld [vmem:[%s5 + $0x8] sm:$0xff]
        %v1643 = vld [vmem:[%s5 + $0x10] sm:$0xff]
        %v1644 = vld [vmem:[%s5 + $0x18] sm:$0xff]
        %v1645 = vld [vmem:[%s5 + $0x20] sm:$0xff]
        %v1646 = vld [vmem:[%s5 + $0x28] sm:$0xff]
        %v1647 = vld [vmem:[%s5 + $0x30] sm:$0xff]
        %v1648 = vld [vmem:[%s5 + $0x38] sm:$0xff]
        %v1649 = vld [vmem:[%s5 + $0x40] sm:$0xff]
        %v1650 = vld [vmem:[%s5 + $0x48] sm:$0xff]
        %v1651 = vld [vmem:[%s5 + $0x50] sm:$0xff]
        %v1652 = vld [vmem:[%s5 + $0x58] sm:$0xff]
        %v1653 = vld [vmem:[%s5 + $0x60] sm:$0xff]
        %v1654 = vld [vmem:[%s5 + $0x68] sm:$0xff]
        %v1655 = vld [vmem:[%s5 + $0x70] sm:$0xff]
        %v1656 = vld [vmem:[%s5 + $0x78] sm:$0xff]
        %1657 = vmatprep.subr.mxu0 0.0
        %1658 = vmatpush1.msra.mxu0 %v1656
        %1659 = vmatprep.subr.mxu0 0.0
        %1660 = vmatpush1.msra.mxu0 %v1655
        %1661 = vmatprep.subr.mxu0 0.0
        %1662 = vmatpush1.msra.mxu0 %v1654
        %1663 = vmatprep.subr.mxu0 0.0
        %1664 = vmatpush1.msra.mxu0 %v1653
        %1665 = vmatprep.subr.mxu0 0.0
        %1666 = vmatpush1.msra.mxu0 %v1652
        %1667 = vmatprep.subr.mxu0 0.0
        %1668 = vmatpush1.msra.mxu0 %v1651
        %1669 = vmatprep.subr.mxu0 0.0
        %1670 = vmatpush1.msra.mxu0 %v1650
        %1671 = vmatprep.subr.mxu0 0.0
        %1672 = vmatpush1.msra.mxu0 %v1649
        %1673 = vmatprep.subr.mxu0 0.0
        %1674 = vmatpush1.msra.mxu0 %v1648
        %1675 = vmatprep.subr.mxu0 0.0
        %1676 = vmatpush1.msra.mxu0 %v1647
        %1677 = vmatprep.subr.mxu0 0.0
        %1678 = vmatpush1.msra.mxu0 %v1646
        %1679 = vmatprep.subr.mxu0 0.0
        %1680 = vmatpush1.msra.mxu0 %v1645
        %1681 = vmatprep.subr.mxu0 0.0
        %1682 = vmatpush1.msra.mxu0 %v1644
        %1683 = vmatprep.subr.mxu0 0.0
        %1684 = vmatpush1.msra.mxu0 %v1643
        %1685 = vmatprep.subr.mxu0 0.0
        %1686 = vmatpush1.msra.mxu0 %v1642
        %1687 = vmatprep.subr.mxu0 0.0
        %1688 = vmatpush1.msra.mxu0 %v1641
        %1689 = vmatprep.subr.mxu0 0.0
        %1690 = vmatpush2.msra.mxu0 0.0
        %1691 = vmatprep.subr.mxu0 0.0
        %1692 = vmatpush2.msra.mxu0 0.0
        %1693 = vmatprep.subr.mxu0 0.0
        %1694 = vmatpush2.msra.mxu0 0.0
        %1695 = vmatprep.subr.mxu0 0.0
        %1696 = vmatpush2.msra.mxu0 0.0
        %1697 = vmatprep.subr.mxu0 0.0
        %1698 = vmatpush2.msra.mxu0 0.0
        %1699 = vmatprep.subr.mxu0 0.0
        %1700 = vmatpush2.msra.mxu0 0.0
        %1701 = vmatprep.subr.mxu0 0.0
        %1702 = vmatpush2.msra.mxu0 0.0
        %1703 = vmatprep.subr.mxu0 0.0
        %1704 = vmatpush2.msra.mxu0 0.0
        %1705 = vmatprep.subr.mxu0 0.0
        %1706 = vmatpush2.msra.mxu0 0.0
        %1707 = vmatprep.subr.mxu0 0.0
        %1708 = vmatpush2.msra.mxu0 0.0
        %1709 = vmatprep.subr.mxu0 0.0
        %1710 = vmatpush2.msra.mxu0 0.0
        %1711 = vmatprep.subr.mxu0 0.0
        %1712 = vmatpush2.msra.mxu0 0.0
        %1713 = vmatprep.subr.mxu0 0.0
        %1714 = vmatpush2.msra.mxu0 0.0
        %1715 = vmatprep.subr.mxu0 0.0
        %1716 = vmatpush2.msra.mxu0 0.0
        %1717 = vmatprep.subr.mxu0 0.0
        %1718 = vmatpush2.msra.mxu0 0.0
        %1719 = vmatprep.subr.mxu0 0.0
        %1720 = vmatpush2.msra.mxu0 0.0
        %1721 = vmatprep.mubr.f32.mxu0 0.0
        %1722 = vmatmul.mubr.f32.gmra.mxu0 %v1457
        %v1723 = vpop.f32.mrf.mxu0
        %v1724 = vadd.f32 0.0, %v1723
        %v1725 = vpop.f32.mrf.mxu0
        %1726 = vmatprep.mubr.f32.mxu0 0.0
        %1727 = vmatmul.mubr.f32.gmra.mxu0 %v1458
        %v1728 = vpop.f32.mrf.mxu0
        %v1729 = vadd.f32 0.0, %v1728
        %v1730 = vpop.f32.mrf.mxu0
        %1731 = vmatprep.mubr.f32.mxu0 0.0
        %1732 = vmatmul.mubr.f32.gmra.mxu0 %v1459
        %v1733 = vpop.f32.mrf.mxu0
        %v1734 = vadd.f32 0.0, %v1733
        %v1735 = vpop.f32.mrf.mxu0
        %1736 = vmatprep.mubr.f32.mxu0 0.0
        %1737 = vmatmul.mubr.f32.gmra.mxu0 %v1460
        %v1738 = vpop.f32.mrf.mxu0
        %v1739 = vadd.f32 0.0, %v1738
        %v1740 = vpop.f32.mrf.mxu0
        %1741 = vmatprep.mubr.f32.mxu0 0.0
        %1742 = vmatmul.mubr.f32.gmra.mxu0 %v1461
        %v1743 = vpop.f32.mrf.mxu0
        %v1744 = vadd.f32 0.0, %v1743
        %v1745 = vpop.f32.mrf.mxu0
        %1746 = vmatprep.mubr.f32.mxu0 0.0
        %1747 = vmatmul.mubr.f32.gmra.mxu0 %v1462
        %v1748 = vpop.f32.mrf.mxu0
        %v1749 = vadd.f32 0.0, %v1748
        %v1750 = vpop.f32.mrf.mxu0
        %1751 = vmatprep.mubr.f32.mxu0 0.0
        %1752 = vmatmul.mubr.f32.gmra.mxu0 %v1463
        %v1753 = vpop.f32.mrf.mxu0
        %v1754 = vadd.f32 0.0, %v1753
        %v1755 = vpop.f32.mrf.mxu0
        %1756 = vmatprep.mubr.f32.mxu0 0.0
        %1757 = vmatmul.mubr.f32.gmra.mxu0 %v1464
        %v1758 = vpop.f32.mrf.mxu0
        %v1759 = vadd.f32 0.0, %v1758
        %v1760 = vpop.f32.mrf.mxu0
        %1761 = vmatprep.mubr.f32.mxu0 0.0
        %1762 = vmatmul.mubr.f32.gmra.mxu0 %v1465
        %v1763 = vpop.f32.mrf.mxu0
        %v1764 = vadd.f32 0.0, %v1763
        %v1765 = vpop.f32.mrf.mxu0
        %1766 = vmatprep.mubr.f32.mxu0 0.0
        %1767 = vmatmul.mubr.f32.gmra.mxu0 %v1466
        %v1768 = vpop.f32.mrf.mxu0
        %v1769 = vadd.f32 0.0, %v1768
        %v1770 = vpop.f32.mrf.mxu0
        %1771 = vmatprep.mubr.f32.mxu0 0.0
        %1772 = vmatmul.mubr.f32.gmra.mxu0 %v1467
        %v1773 = vpop.f32.mrf.mxu0
        %v1774 = vadd.f32 0.0, %v1773
        %v1775 = vpop.f32.mrf.mxu0
        %1776 = vmatprep.mubr.f32.mxu0 0.0
        %1777 = vmatmul.mubr.f32.gmra.mxu0 %v1468
        %v1778 = vpop.f32.mrf.mxu0
        %v1779 = vadd.f32 0.0, %v1778
        %v1780 = vpop.f32.mrf.mxu0
        %1781 = vmatprep.mubr.f32.mxu0 0.0
        %1782 = vmatmul.mubr.f32.gmra.mxu0 %v1469
        %v1783 = vpop.f32.mrf.mxu0
        %v1784 = vadd.f32 0.0, %v1783
        %v1785 = vpop.f32.mrf.mxu0
        %1786 = vmatprep.mubr.f32.mxu0 0.0
        %1787 = vmatmul.mubr.f32.gmra.mxu0 %v1470
        %v1788 = vpop.f32.mrf.mxu0
        %v1789 = vadd.f32 0.0, %v1788
        %v1790 = vpop.f32.mrf.mxu0
        %1791 = vmatprep.mubr.f32.mxu0 0.0
        %1792 = vmatmul.mubr.f32.gmra.mxu0 %v1471
        %v1793 = vpop.f32.mrf.mxu0
        %v1794 = vadd.f32 0.0, %v1793
        %v1795 = vpop.f32.mrf.mxu0
        %1796 = vmatprep.mubr.f32.mxu0 0.0
        %1797 = vmatmul.mubr.f32.gmra.mxu0 %v1472
        %v1798 = vpop.f32.mrf.mxu0
        %v1799 = vadd.f32 0.0, %v1798
        %v1800 = vpop.f32.mrf.mxu0
        %1801 = vdwg.mxu0
        %v1802 = vadd.f32 %v1563, %v1724
        %v1803 = vadd.f32 %v1568, %v1729
        %v1804 = vadd.f32 %v1573, %v1734
        %v1805 = vadd.f32 %v1578, %v1739
        %v1806 = vadd.f32 %v1583, %v1744
        %v1807 = vadd.f32 %v1588, %v1749
        %v1808 = vadd.f32 %v1593, %v1754
        %v1809 = vadd.f32 %v1598, %v1759
        %v1810 = vadd.f32 %v1603, %v1764
        %v1811 = vadd.f32 %v1608, %v1769
        %v1812 = vadd.f32 %v1613, %v1774
        %v1813 = vadd.f32 %v1618, %v1779
        %v1814 = vadd.f32 %v1623, %v1784
        %v1815 = vadd.f32 %v1628, %v1789
        %v1816 = vadd.f32 %v1633, %v1794
        %v1817 = vadd.f32 %v1638, %v1799
        %v1818 = vmax.f32 %v1802, 0.0
        %v1819 = vmax.f32 %v1803, 0.0
        %v1820 = vmax.f32 %v1804, 0.0
        %v1821 = vmax.f32 %v1805, 0.0
        %v1822 = vmax.f32 %v1806, 0.0
        %v1823 = vmax.f32 %v1807, 0.0
        %v1824 = vmax.f32 %v1808, 0.0
        %v1825 = vmax.f32 %v1809, 0.0
        %v1826 = vmax.f32 %v1810, 0.0
        %v1827 = vmax.f32 %v1811, 0.0
        %v1828 = vmax.f32 %v1812, 0.0
        %v1829 = vmax.f32 %v1813, 0.0
        %v1830 = vmax.f32 %v1814, 0.0
        %v1831 = vmax.f32 %v1815, 0.0
        %v1832 = vmax.f32 %v1816, 0.0
        %v1833 = vmax.f32 %v1817, 0.0
        %v1834 = vld [vmem:[%s6] sm:$0xff]
        %v1835 = vld [vmem:[%s6 + $0x8] sm:$0xff]
        %v1836 = vld [vmem:[%s6 + $0x10] sm:$0xff]
        %v1837 = vld [vmem:[%s6 + $0x18] sm:$0xff]
        %v1838 = vld [vmem:[%s6 + $0x20] sm:$0xff]
        %v1839 = vld [vmem:[%s6 + $0x28] sm:$0xff]
        %v1840 = vld [vmem:[%s6 + $0x30] sm:$0xff]
        %v1841 = vld [vmem:[%s6 + $0x38] sm:$0xff]
        %v1842 = vld [vmem:[%s6 + $0x40] sm:$0xff]
        %v1843 = vld [vmem:[%s6 + $0x48] sm:$0xff]
        %v1844 = vld [vmem:[%s6 + $0x50] sm:$0xff]
        %v1845 = vld [vmem:[%s6 + $0x58] sm:$0xff]
        %v1846 = vld [vmem:[%s6 + $0x60] sm:$0xff]
        %v1847 = vld [vmem:[%s6 + $0x68] sm:$0xff]
        %v1848 = vld [vmem:[%s6 + $0x70] sm:$0xff]
        %v1849 = vld [vmem:[%s6 + $0x78] sm:$0xff]
        %v1850 = vld [vmem:[%s7] sm:$0x1]
        %v1852 = vlaneseq
        %v1853 = vshrl.u32 %v1852, 7
        %v1854 = vsub.s32 0, %v1853
        %v1855 = vrot.slane %v1850, %v1854
        %1857 = vmatprep.subr.mxu0 0.0
        %1858 = vmatpush1.msra.mxu0 %v1849
        %1859 = vmatprep.subr.mxu0 0.0
        %1860 = vmatpush1.msra.mxu0 %v1848
        %1861 = vmatprep.subr.mxu0 0.0
        %1862 = vmatpush1.msra.mxu0 %v1847
        %1863 = vmatprep.subr.mxu0 0.0
        %1864 = vmatpush1.msra.mxu0 %v1846
        %1865 = vmatprep.subr.mxu0 0.0
        %1866 = vmatpush1.msra.mxu0 %v1845
        %1867 = vmatprep.subr.mxu0 0.0
        %1868 = vmatpush1.msra.mxu0 %v1844
        %1869 = vmatprep.subr.mxu0 0.0
        %1870 = vmatpush1.msra.mxu0 %v1843
        %1871 = vmatprep.subr.mxu0 0.0
        %1872 = vmatpush1.msra.mxu0 %v1842
        %1873 = vmatprep.subr.mxu0 0.0
        %1874 = vmatpush1.msra.mxu0 %v1841
        %1875 = vmatprep.subr.mxu0 0.0
        %1876 = vmatpush1.msra.mxu0 %v1840
        %1877 = vmatprep.subr.mxu0 0.0
        %1878 = vmatpush1.msra.mxu0 %v1839
        %1879 = vmatprep.subr.mxu0 0.0
        %1880 = vmatpush1.msra.mxu0 %v1838
        %1881 = vmatprep.subr.mxu0 0.0
        %1882 = vmatpush1.msra.mxu0 %v1837
        %1883 = vmatprep.subr.mxu0 0.0
        %1884 = vmatpush1.msra.mxu0 %v1836
        %1885 = vmatprep.subr.mxu0 0.0
        %1886 = vmatpush1.msra.mxu0 %v1835
        %1887 = vmatprep.subr.mxu0 0.0
        %1888 = vmatpush1.msra.mxu0 %v1834
        %1889 = vmatprep.subr.mxu0 0.0
        %1890 = vmatpush2.msra.mxu0 0.0
        %1891 = vmatprep.subr.mxu0 0.0
        %1892 = vmatpush2.msra.mxu0 0.0
        %1893 = vmatprep.subr.mxu0 0.0
        %1894 = vmatpush2.msra.mxu0 0.0
        %1895 = vmatprep.subr.mxu0 0.0
        %1896 = vmatpush2.msra.mxu0 0.0
        %1897 = vmatprep.subr.mxu0 0.0
        %1898 = vmatpush2.msra.mxu0 0.0
        %1899 = vmatprep.subr.mxu0 0.0
        %1900 = vmatpush2.msra.mxu0 0.0
        %1901 = vmatprep.subr.mxu0 0.0
        %1902 = vmatpush2.msra.mxu0 0.0
        %1903 = vmatprep.subr.mxu0 0.0
        %1904 = vmatpush2.msra.mxu0 0.0
        %1905 = vmatprep.subr.mxu0 0.0
        %1906 = vmatpush2.msra.mxu0 0.0
        %1907 = vmatprep.subr.mxu0 0.0
        %1908 = vmatpush2.msra.mxu0 0.0
        %1909 = vmatprep.subr.mxu0 0.0
        %1910 = vmatpush2.msra.mxu0 0.0
        %1911 = vmatprep.subr.mxu0 0.0
        %1912 = vmatpush2.msra.mxu0 0.0
        %1913 = vmatprep.subr.mxu0 0.0
        %1914 = vmatpush2.msra.mxu0 0.0
        %1915 = vmatprep.subr.mxu0 0.0
        %1916 = vmatpush2.msra.mxu0 0.0
        %1917 = vmatprep.subr.mxu0 0.0
        %1918 = vmatpush2.msra.mxu0 0.0
        %1919 = vmatprep.subr.mxu0 0.0
        %1920 = vmatpush2.msra.mxu0 0.0
        %1921 = vmatprep.mubr.f32.mxu0 0.0
        %1922 = vmatmul.mubr.f32.gmra.mxu0 %v1818
        %v1923 = vpop.f32.mrf.mxu0
        %v1924 = vadd.f32 %v1855, %v1923
        %v1925 = vpop.f32.mrf.mxu0
        %1926 = vmatprep.mubr.f32.mxu0 0.0
        %1927 = vmatmul.mubr.f32.gmra.mxu0 %v1819
        %v1928 = vpop.f32.mrf.mxu0
        %v1929 = vadd.f32 %v1855, %v1928
        %v1930 = vpop.f32.mrf.mxu0
        %1931 = vmatprep.mubr.f32.mxu0 0.0
        %1932 = vmatmul.mubr.f32.gmra.mxu0 %v1820
        %v1933 = vpop.f32.mrf.mxu0
        %v1934 = vadd.f32 %v1855, %v1933
        %v1935 = vpop.f32.mrf.mxu0
        %1936 = vmatprep.mubr.f32.mxu0 0.0
        %1937 = vmatmul.mubr.f32.gmra.mxu0 %v1821
        %v1938 = vpop.f32.mrf.mxu0
        %v1939 = vadd.f32 %v1855, %v1938
        %v1940 = vpop.f32.mrf.mxu0
        %1941 = vmatprep.mubr.f32.mxu0 0.0
        %1942 = vmatmul.mubr.f32.gmra.mxu0 %v1822
        %v1943 = vpop.f32.mrf.mxu0
        %v1944 = vadd.f32 %v1855, %v1943
        %v1945 = vpop.f32.mrf.mxu0
        %1946 = vmatprep.mubr.f32.mxu0 0.0
        %1947 = vmatmul.mubr.f32.gmra.mxu0 %v1823
        %v1948 = vpop.f32.mrf.mxu0
        %v1949 = vadd.f32 %v1855, %v1948
        %v1950 = vpop.f32.mrf.mxu0
        %1951 = vmatprep.mubr.f32.mxu0 0.0
        %1952 = vmatmul.mubr.f32.gmra.mxu0 %v1824
        %v1953 = vpop.f32.mrf.mxu0
        %v1954 = vadd.f32 %v1855, %v1953
        %v1955 = vpop.f32.mrf.mxu0
        %1956 = vmatprep.mubr.f32.mxu0 0.0
        %1957 = vmatmul.mubr.f32.gmra.mxu0 %v1825
        %v1958 = vpop.f32.mrf.mxu0
        %v1959 = vadd.f32 %v1855, %v1958
        %v1960 = vpop.f32.mrf.mxu0
        %1961 = vmatprep.mubr.f32.mxu0 0.0
        %1962 = vmatmul.mubr.f32.gmra.mxu0 %v1826
        %v1963 = vpop.f32.mrf.mxu0
        %v1964 = vadd.f32 %v1855, %v1963
        %v1965 = vpop.f32.mrf.mxu0
        %1966 = vmatprep.mubr.f32.mxu0 0.0
        %1967 = vmatmul.mubr.f32.gmra.mxu0 %v1827
        %v1968 = vpop.f32.mrf.mxu0
        %v1969 = vadd.f32 %v1855, %v1968
        %v1970 = vpop.f32.mrf.mxu0
        %1971 = vmatprep.mubr.f32.mxu0 0.0
        %1972 = vmatmul.mubr.f32.gmra.mxu0 %v1828
        %v1973 = vpop.f32.mrf.mxu0
        %v1974 = vadd.f32 %v1855, %v1973
        %v1975 = vpop.f32.mrf.mxu0
        %1976 = vmatprep.mubr.f32.mxu0 0.0
        %1977 = vmatmul.mubr.f32.gmra.mxu0 %v1829
        %v1978 = vpop.f32.mrf.mxu0
        %v1979 = vadd.f32 %v1855, %v1978
        %v1980 = vpop.f32.mrf.mxu0
        %1981 = vmatprep.mubr.f32.mxu0 0.0
        %1982 = vmatmul.mubr.f32.gmra.mxu0 %v1830
        %v1983 = vpop.f32.mrf.mxu0
        %v1984 = vadd.f32 %v1855, %v1983
        %v1985 = vpop.f32.mrf.mxu0
        %1986 = vmatprep.mubr.f32.mxu0 0.0
        %1987 = vmatmul.mubr.f32.gmra.mxu0 %v1831
        %v1988 = vpop.f32.mrf.mxu0
        %v1989 = vadd.f32 %v1855, %v1988
        %v1990 = vpop.f32.mrf.mxu0
        %1991 = vmatprep.mubr.f32.mxu0 0.0
        %1992 = vmatmul.mubr.f32.gmra.mxu0 %v1832
        %v1993 = vpop.f32.mrf.mxu0
        %v1994 = vadd.f32 %v1855, %v1993
        %v1995 = vpop.f32.mrf.mxu0
        %1996 = vmatprep.mubr.f32.mxu0 0.0
        %1997 = vmatmul.mubr.f32.gmra.mxu0 %v1833
        %v1998 = vpop.f32.mrf.mxu0
        %v1999 = vadd.f32 %v1855, %v1998
        %v2000 = vpop.f32.mrf.mxu0
        %2001 = vdwg.mxu0
        %2002 = vst [vmem:[%s338] sm:$0xff] %v1924
        %2003 = vst [vmem:[%s338 + $0x8] sm:$0xff] %v1929
        %2004 = vst [vmem:[%s338 + $0x10] sm:$0xff] %v1934
        %2005 = vst [vmem:[%s338 + $0x18] sm:$0xff] %v1939
        %2006 = vst [vmem:[%s338 + $0x20] sm:$0xff] %v1944
        %2007 = vst [vmem:[%s338 + $0x28] sm:$0xff] %v1949
        %2008 = vst [vmem:[%s338 + $0x30] sm:$0xff] %v1954
        %2009 = vst [vmem:[%s338 + $0x38] sm:$0xff] %v1959
        %2010 = vst [vmem:[%s338 + $0x40] sm:$0xff] %v1964
        %2011 = vst [vmem:[%s338 + $0x48] sm:$0xff] %v1969
        %2012 = vst [vmem:[%s338 + $0x50] sm:$0xff] %v1974
        %2013 = vst [vmem:[%s338 + $0x58] sm:$0xff] %v1979
        %2014 = vst [vmem:[%s338 + $0x60] sm:$0xff] %v1984
        %2015 = vst [vmem:[%s338 + $0x68] sm:$0xff] %v1989
        %2016 = vst [vmem:[%s338 + $0x70] sm:$0xff] %v1994
        %2017 = vst [vmem:[%s338 + $0x78] sm:$0xff] %v1999
      $region60: #{hetero_gcn_forward.1} parent=51 // pred_fallthru
        _
      %s2018 = smul.u32 16, %s23
      %p2019 = scmp.lt.s32.totalorder %s2018, 31
      %s2020 = scalar_select %p2019, %s2018, 31
      %s2021 = smul.addr %s2020, 8
      %s2022 = scalar_lea.vmem %s8, %s2021
      // Predicated region
      $region61: #{hetero_gcn_forward.1} parent=51 // pred_check
        %p2023 = pneg %p227
      $region62: #{hetero_gcn_forward.1} parent=51 // pred_check_branch
        %2025 = sbr.rel (%p2023) target = $region64
      $region63: #{hetero_gcn_forward.1} parent=51 // pred_region
        %s2026 = smul.u32 16, %s23
      $region64: #{hetero_gcn_forward.1} parent=51 // pred_fallthru
        _
    $region52: #{hetero_gcn_forward.1} parent=5 // pred_fallthru
      _
    %p2027 = scmp.le.s32.totalorder 2, %s14
    // Predicated region
    $region65: #{hetero_gcn_forward.1} parent=5 // pred_check
      %p2028 = pneg %p2027
    $region66: #{hetero_gcn_forward.1} parent=5 // pred_check_branch
      %2030 = sbr.rel (%p2028) target = $region68
    $region67: #{hetero_gcn_forward.1} parent=5 // pred_region
      %s2031 = ssub.s32 %s14, 2
      // Predicated region
      $region69: #{hetero_gcn_forward.1} parent=67 // pred_check
        %p2032 = pneg %p233
      $region70: #{hetero_gcn_forward.1} parent=67 // pred_check_branch
        %2034 = sbr.rel (%p2032) target = $region72
      $region71: #{hetero_gcn_forward.1} parent=67 // pred_region
        %s2035 = smul.u32 16, %s25
        %p2036 = scmp.lt.s32.totalorder %s2035, 31
        %s2037 = scalar_select %p2036, %s2035, 31
        %s2038 = smul.addr %s2037, 8
        %s2039 = scalar_lea.vmem %s8, %s2038
      $region72: #{hetero_gcn_forward.1} parent=67 // pred_fallthru
        _
    $region68: #{hetero_gcn_forward.1} parent=5 // pred_fallthru
      _
  $region6: #{hetero_gcn_forward.1} parent=0 // loop_footer
    %s18 = sadd.s32 1, %s14
  $region7: #{hetero_gcn_forward.1} parent=0 // loop_footer_branch
    %13 = sbr.rel target = $region3
  $region8: #{hetero_gcn_forward.1} parent=0 // loop_exit
    _

</llo_original>
